<compile_context>
chip_gen: v7x
topology: tpu7x:2x2x1
jax: 0.10.0
libtpu: 0.0.40
codegen_flags: <defaults>
</compile_context>

<pallas_src>
import jax
import jax.numpy as jnp
from jax.experimental import pallas as pl
from jax.experimental.pallas import tpu as pltpu


def relu_conv1x1_kernel(x_ref, w_ref, o_ref):
    # x_ref: (Cin, HW) bf16 activations for one batch element.
    # w_ref: (Cout_tile, Cin) bf16 weight tile.
    # o_ref: (Cout_tile, HW) f32 output tile.
    x = jnp.maximum(x_ref[...], jnp.zeros((), x_ref.dtype))     # fused ReLU (VPU)
    o_ref[...] = jnp.dot(
        w_ref[...], x, preferred_element_type=jnp.float32        # MXU, f32 accum
    ).astype(o_ref.dtype)


def relu_conv1x1(x_nchw, weight_oihw, *, cout_tiles=2):
    """ReLU followed by a bias-free 1x1 conv (PyTorch Conv2d semantics).

    x_nchw:      (N, Cin, H, W)    float32
    weight_oihw: (Cout, Cin, 1, 1) float32
    returns:     (N, Cout, H, W)   float32
    """
    N, Cin, H, W = x_nchw.shape
    Cout = weight_oihw.shape[0]
    HW = H * W
    assert Cout % cout_tiles == 0
    tco = Cout // cout_tiles            # 448 for Cout=896, cout_tiles=2
    assert tco % 8 == 0 and Cin % 8 == 0

    # NCHW -> (N, Cin, HW) is a free, contiguous reshape (no transpose needed).
    # Cast operands to bf16: MXU-native on v5e/v6e/v7x, halves the weight DMA.
    x3 = x_nchw.reshape(N, Cin, HW).astype(jnp.bfloat16)
    w_mat = weight_oihw.reshape(Cout, Cin).astype(jnp.bfloat16)

    cost = pl.CostEstimate(
        flops=2 * N * HW * Cin * Cout,
        transcendentals=0,
        bytes_accessed=2 * N * Cin * HW + 2 * Cin * Cout + 4 * N * Cout * HW,
    )

    out3 = pl.pallas_call(
        relu_conv1x1_kernel,
        out_shape=jax.ShapeDtypeStruct((N, Cout, HW), jnp.float32),
        grid_spec=pltpu.PrefetchScalarGridSpec(
            num_scalar_prefetch=0,
            grid=(N, cout_tiles),
            in_specs=[
                # Full (Cin, HW) activation slab; same block for every Cout
                # tile j -> fetched once, stays resident across the j axis.
                pl.BlockSpec((None, Cin, HW), lambda n, j: (n, 0, 0)),
                # Weight tiled along Cout so its DMA pipelines with the MXU.
                pl.BlockSpec((tco, Cin), lambda n, j: (j, 0)),
            ],
            out_specs=pl.BlockSpec((None, tco, HW), lambda n, j: (n, j, 0)),
        ),
        compiler_params=pltpu.CompilerParams(
            # Both axes independent; on v7x the Cout tiles shard across the
            # two TensorCores.
            dimension_semantics=("parallel", "parallel"),
            # Explicit limit so v5e (16 MiB default scoped VMEM) has headroom;
            # double-buffered footprint here is only ~3 MiB.
            vmem_limit_bytes=32 * 1024 * 1024,
        ),
        cost_estimate=cost,
    )(x3, w_mat)

    # (N, Cout, HW) -> NCHW is a free, contiguous reshape.
    return out3.reshape(N, Cout, H, W)


if __name__ == "__main__":
    key = jax.random.PRNGKey(0)
    k_x, k_w = jax.random.split(key)

    # Shapes implied by the module: input (1, 896, 14, 14), weight (896, 896, 1, 1).
    N, Cin, H, W = 1, 896, 14, 14
    Cout = 896

    x = jax.random.normal(k_x, (N, Cin, H, W), dtype=jnp.float32)
    # Deterministic Kaiming-uniform-like init for the conv weight.
    fan_in = Cin * 1 * 1
    bound = (1.0 / fan_in) ** 0.5
    w = jax.random.uniform(
        k_w, (Cout, Cin, 1, 1), dtype=jnp.float32, minval=-bound, maxval=bound
    )

    out = relu_conv1x1(x, w)
    out = jax.block_until_ready(out)
    assert out.shape == (N, Cout, H, W)

    # Reference built from the SAME bf16-rounded operands the kernel sees,
    # accumulated in full f32 precision (so only accumulation-order noise
    # remains, well under 1e-3).
    x_bf = jnp.maximum(x, 0.0).astype(jnp.bfloat16).astype(jnp.float32)
    w_bf = w.reshape(Cout, Cin).astype(jnp.bfloat16).astype(jnp.float32)
    ref = jnp.einsum(
        "nchw,oc->nohw", x_bf.reshape(N, Cin, H, W), w_bf,
        precision=jax.lax.Precision.HIGHEST,
    )
    assert jnp.allclose(out, ref, atol=1e-3, rtol=1e-3)

    # Sanity check against the pure-f32 reference (loose tolerance for the
    # bf16 operand rounding).
    ref_f32 = jnp.einsum(
        "nchw,oc->nohw", jnp.maximum(x, 0.0), w.reshape(Cout, Cin),
        precision=jax.lax.Precision.HIGHEST,
    )
    assert jnp.allclose(out, ref_f32, atol=5e-2, rtol=5e-2)

    print("KERNEL_OK")
</pallas_src>

<mosaic_0001>
module attributes {stable_mosaic.version = 11 : i64} {
  func.func @relu_conv1x1_kernel(%arg0: i32, %arg1: i32, %arg2: memref<1x896x196xbf16, #tpu.memory_space<vmem>>, %arg3: memref<448x896xbf16, #tpu.memory_space<vmem>>, %arg4: memref<1x448x196xf32, #tpu.memory_space<vmem>>) attributes {dimension_semantics = [#tpu.dimension_semantics<parallel>, #tpu.dimension_semantics<parallel>], iteration_bounds = array<i64: 1, 2>, scalar_prefetch = 0 : i64, scratch_operands = 0 : i64, tpu.core_type = #tpu.core_type<tc>, window_params = [{transform_indices = @transform_0, window_bounds = array<i64: 1, 896, 196>}, {transform_indices = @transform_1, window_bounds = array<i64: 448, 896>}, {transform_indices = @transform_2, window_bounds = array<i64: 1, 448, 196>}]} {
    %c0 = arith.constant 0 : index
    %c0_0 = arith.constant 0 : index
    %c0_1 = arith.constant 0 : index
    %0 = vector.load %arg2[%c0, %c0_0, %c0_1] : memref<1x896x196xbf16, #tpu.memory_space<vmem>>, vector<1x896x196xbf16>
    %1 = vector.shape_cast %0 : vector<1x896x196xbf16> to vector<896x196xbf16>
    %cst = arith.constant 0.000000e+00 : bf16
    %2 = vector.broadcast %cst : bf16 to vector<896x196xbf16>
    %3 = arith.maximumf %1, %2 : vector<896x196xbf16>
    %c0_2 = arith.constant 0 : index
    %c0_3 = arith.constant 0 : index
    %4 = vector.load %arg3[%c0_2, %c0_3] : memref<448x896xbf16, #tpu.memory_space<vmem>>, vector<448x896xbf16>
    %cst_4 = arith.constant dense<0.000000e+00> : vector<448x196xf32>
    %5 = tpu.matmul %4, %3, %cst_4 {dimension_numbers = #tpu.dot_dimension_numbers<[1], [0], [0], [1], [0, 0, 1, 1], [], []>} : vector<448x896xbf16>, vector<896x196xbf16>, vector<448x196xf32> -> vector<448x196xf32>
    %c0_5 = arith.constant 0 : index
    %c0_6 = arith.constant 0 : index
    %c0_7 = arith.constant 0 : index
    %6 = vector.load %arg4[%c0_5, %c0_6, %c0_7] : memref<1x448x196xf32, #tpu.memory_space<vmem>>, vector<1x448x196xf32>
    %7 = vector.shape_cast %6 : vector<1x448x196xf32> to vector<448x196xf32>
    %8 = vector.shape_cast %5 : vector<448x196xf32> to vector<1x448x196xf32>
    tpu.vector_store %arg4[%c0_5, %c0_6, %c0_7], %8 {strides = array<i32>} : memref<1x448x196xf32, #tpu.memory_space<vmem>>, vector<1x448x196xf32>,
    return
  }
  func.func @transform_0(%arg0: i32, %arg1: i32) -> (i32, i32, i32) {
    %c0_i32 = arith.constant 0 : i32
    %c0_i32_0 = arith.constant 0 : i32
    %c0_i32_1 = arith.constant 0 : i32
    return %arg0, %c0_i32, %c0_i32_0 : i32, i32, i32
  }
  func.func @transform_1(%arg0: i32, %arg1: i32) -> (i32, i32) {
    %c0_i32 = arith.constant 0 : i32
    %c0_i32_0 = arith.constant 0 : i32
    return %arg1, %c0_i32 : i32, i32
  }
  func.func @transform_2(%arg0: i32, %arg1: i32) -> (i32, i32, i32) {
    %c0_i32 = arith.constant 0 : i32
    %c0_i32_0 = arith.constant 0 : i32
    return %arg0, %arg1, %c0_i32 : i32, i32, i32
  }
}

</mosaic_0001>

<llo_original>
// kernel: tpu_custom_call.1
$region0: #{tpu_custom_call.1}
  #allocation0 [shape = 'u32[]', space=smem, size = 0x4, offset = 0x4, fixed_abs, tag = 'smem constant byte address 0x4 - core index']
  #allocation1 [shape = 'u32[144,128]{1,0:T(1,128)}', space=vmem, size = 0x12000, scoped, tag = 'internal scratch']
  %s0 = inlined_call_operand.vmem [shape: bf16[1,896,196], index: 0, kind: input, shape index: {}]
  %s1 = inlined_call_operand.hbm [shape: bf16[896,896], index: 1, kind: input, shape index: {}]
  %s2 = inlined_call_operand.vmem [shape: f32[1,896,196], index: 2, kind: output, shape index: {}]
  %s3 = sld [smem:[#allocation0]]
  $region45: #{tpu_custom_call.1} parent=0
    _
  %s5 = ssub.s32 1, %s3
  %s6 = scalar_select 0, %s5, %s3
  $region1: #{tpu_custom_call.1} parent=0
    #allocation2 [shape = 'u8[1605632]{0}', space=vmem, size = 0x188000, scoped, tag = 'input window, operand 1']
    #allocation3 [shape = 's32[2]{0}', space=sflag, size = 0x8, scoped, tag = 'scoped memory for tpu_custom_call.1']
    %7 = vsyncpa [#allocation3], 0
    %s8 = scalar_lea.sflag [#allocation3], 1
    %9 = vsyncpa %s8, 0
    loop: start=0, step=1, limit=4
    $region2: #{tpu_custom_call.1} parent=1 // loop_pre_header
      _
    $region3: #{tpu_custom_call.1} parent=1 // loop_header
      %s11 = sphi 0, %s15
      %p12 = scmp.ge.s32.totalorder %s11, 4
      %s18 = sphi 0, %s30
      %s19 = sphi 0, %s26
      %s20 = sphi 0, %s18
      %s21 = sphi 0, %s19
      %s22 = sphi 0, %s20
      %s23 = sphi 0, %s21
      %s33 = sphi 0, %s35
      %s36 = sphi 0, %s33
      %s37 = sphi 0, %s36
      %s53 = sphi 0, %s37
      %s59 = sphi 0, %s61
      %s62 = sphi 0, %s59
      %s63 = sphi 0, %s62
      %s79 = sphi 0, %s63
      %s87 = sphi 0, %s89
      %s90 = sphi 0, %s87
      %s91 = sphi 0, %s90
      %s107 = sphi 0, %s91
    $region4: #{tpu_custom_call.1} parent=1 // loop_header_branch
      %14 = sbr.rel (%p12) target = $region8
    $region5: #{tpu_custom_call.1} parent=1 // loop_body
      %s16 = ssub.s32 %s11, 1
      %s17 = ssub.s32 %s11, 2
      %s24 = sadd.s32 1, %s19
      %p25 = scmp.ge.s32.totalorder %s24, 2
      %s26 = scalar_select %p25, 0, %s24
      %s27 = sadd.s32 1, %s18
      %s28 = scalar_select %p25, %s27, %s18
      %p29 = scmp.ge.s32.totalorder %s28, 1
      %s30 = scalar_select %p29, 0, %s28
      %s31 = ssub.s32 %s18, %s30
      %p32 = scmp.eq.s32.totalorder %s31, 0
      %s34 = sadd.s32 %s33, 1
      %s35 = scalar_select %p32, %s33, %s34
      %p38 = pneg %p32
      %p39 = scmp.eq.s32.totalorder %s11, 1
      %p40 = por %p38, %p39
      %p41 = scmp.ne.s32.totalorder %s33, %s36
      %p42 = scmp.eq.s32.totalorder %s11, 0
      %p43 = por %p41, %p42
      %p44 = scmp.ne.s32.totalorder %s33, %s36
      %p45 = scmp.eq.s32.totalorder %s16, 1
      %p46 = por %p44, %p45
      %p47 = scmp.ne.s32.totalorder %s36, %s37
      %p48 = scmp.eq.s32.totalorder %s16, 0
      %p49 = por %p47, %p48
      %p50 = scmp.ne.s32.totalorder %s36, %s37
      %p51 = scmp.eq.s32.totalorder %s17, 1
      %p52 = por %p50, %p51
      %p54 = scmp.ne.s32.totalorder %s37, %s53
      %p55 = scmp.eq.s32.totalorder %s17, 0
      %p56 = por %p54, %p55
      %s57 = ssub.s32 %s19, %s26
      %p58 = scmp.eq.s32.totalorder %s57, 0
      %s60 = sadd.s32 %s59, 1
      %s61 = scalar_select %p58, %s59, %s60
      %p64 = pneg %p58
      %p65 = scmp.eq.s32.totalorder %s11, 1
      %p66 = por %p64, %p65
      %p67 = scmp.ne.s32.totalorder %s59, %s62
      %p68 = scmp.eq.s32.totalorder %s11, 0
      %p69 = por %p67, %p68
      %p70 = scmp.ne.s32.totalorder %s59, %s62
      %p71 = scmp.eq.s32.totalorder %s16, 1
      %p72 = por %p70, %p71
      %p73 = scmp.ne.s32.totalorder %s62, %s63
      %p74 = scmp.eq.s32.totalorder %s16, 0
      %p75 = por %p73, %p74
      %p76 = scmp.ne.s32.totalorder %s62, %s63
      %p77 = scmp.eq.s32.totalorder %s17, 1
      %p78 = por %p76, %p77
      %p80 = scmp.ne.s32.totalorder %s63, %s79
      %p81 = scmp.eq.s32.totalorder %s17, 0
      %p82 = por %p80, %p81
      %s83 = ssub.s32 %s18, %s30
      %s84 = ssub.s32 %s19, %s26
      %s85 = sor.u32 %s83, %s84
      %p86 = scmp.eq.s32.totalorder %s85, 0
      %s88 = sadd.s32 %s87, 1
      %s89 = scalar_select %p86, %s87, %s88
      %p92 = pneg %p86
      %p93 = scmp.eq.s32.totalorder %s11, 1
      %p94 = por %p92, %p93
      %p95 = scmp.ne.s32.totalorder %s87, %s90
      %p96 = scmp.eq.s32.totalorder %s11, 0
      %p97 = por %p95, %p96
      %p98 = scmp.ne.s32.totalorder %s87, %s90
      %p99 = scmp.eq.s32.totalorder %s16, 1
      %p100 = por %p98, %p99
      %p101 = scmp.ne.s32.totalorder %s90, %s91
      %p102 = scmp.eq.s32.totalorder %s16, 0
      %p103 = por %p101, %p102
      %p104 = scmp.ne.s32.totalorder %s90, %s91
      %p105 = scmp.eq.s32.totalorder %s17, 1
      %p106 = por %p104, %p105
      %p108 = scmp.ne.s32.totalorder %s91, %s107
      %p109 = scmp.eq.s32.totalorder %s17, 0
      %p110 = por %p108, %p109
      %p111 = scmp.le.s32.totalorder 1, %s11
      %p112 = scmp.lt.s32.totalorder %s11, 3
      %p113 = pnand %p111, %p112
      %p114 = pneg %p113
      // Predicated region
      $region9: #{tpu_custom_call.1} parent=5 // pred_check
        _
      $region10: #{tpu_custom_call.1} parent=5 // pred_check_branch
        %116 = sbr.rel (%p113) target = $region12
      $region11: #{tpu_custom_call.1} parent=5 // pred_region
        %s117 = ssub.s32 %s11, 1
        // Predicated region
        $region13: #{tpu_custom_call.1} parent=11 // pred_check
          %p118 = pneg %p49
        $region14: #{tpu_custom_call.1} parent=11 // pred_check_branch
          %120 = sbr.rel (%p118) target = $region16
        $region15: #{tpu_custom_call.1} parent=11 // pred_region
          %p121 = scmp.lt.s32.totalorder %s20, 0
          %s122 = scalar_select %p121, %s20, 0
          %s123 = smul.addr %s122, 224
          %s124 = smul.addr %s123, 4
          %s125 = scalar_lea.vmem %s0, %s124
        $region16: #{tpu_custom_call.1} parent=11 // pred_fallthru
          _
      $region12: #{tpu_custom_call.1} parent=5 // pred_fallthru
        _
      %p126 = scmp.lt.s32.totalorder %s11, 2
      // Predicated region
      $region17: #{tpu_custom_call.1} parent=5 // pred_check
        %p127 = pneg %p126
      $region18: #{tpu_custom_call.1} parent=5 // pred_check_branch
        %129 = sbr.rel (%p127) target = $region20
      $region19: #{tpu_custom_call.1} parent=5 // pred_region
        // Predicated region
        $region21: #{tpu_custom_call.1} parent=19 // pred_check
          %p130 = pneg %p69
        $region22: #{tpu_custom_call.1} parent=19 // pred_check_branch
          %132 = sbr.rel (%p130) target = $region24
        $region23: #{tpu_custom_call.1} parent=19 // pred_region
          %s133 = sand.u32 %s59, 1
          %s134 = scalar_lea.sflag [#allocation3], %s133
          %s135 = sand.u32 %s59, 1
          %s136 = smul.addr %s135, 1568
          %s137 = scalar_lea.vmem [#allocation2], %s136
          %s138 = smul.u32 56, %s19
          %s140 = ssub.s32 25088, 25088
          %141 = vsyncadd %s134, %s140
          %s142 = smul.addr %s138, 7
          %s143 = smul.addr %s142, 64
          %s144 = scalar_lea.hbm %s1, %s143
          %s145 = sshll.u32 %s137, 4
          %s146 = int_to_ptr.vmem [resolvable:$true] %s145
          %151 = dma.hbm_to_vmem [thread:$0]  %s144, 25088, %s146, %s134, 448, 448, 28
        $region24: #{tpu_custom_call.1} parent=19 // pred_fallthru
          _
      $region20: #{tpu_custom_call.1} parent=5 // pred_fallthru
        _
      %p152 = scmp.le.s32.totalorder 1, %s11
      %p153 = scmp.lt.s32.totalorder %s11, 3
      %p154 = pnand %p152, %p153
      %p155 = pneg %p154
      // Predicated region
      $region25: #{tpu_custom_call.1} parent=5 // pred_check
        _
      $region26: #{tpu_custom_call.1} parent=5 // pred_check_branch
        %157 = sbr.rel (%p154) target = $region28
      $region27: #{tpu_custom_call.1} parent=5 // pred_region
        %s158 = ssub.s32 %s11, 1
        %s159 = sand.u32 %s62, 1
        %s160 = scalar_lea.sflag [#allocation3], %s159
        %s161 = sand.u32 %s62, 1
        %s162 = smul.addr %s161, 1568
        %s163 = scalar_lea.vmem [#allocation2], %s162
        // Predicated region
        $region29: #{tpu_custom_call.1} parent=27 // pred_check
          %p164 = pneg %p75
        $region30: #{tpu_custom_call.1} parent=27 // pred_check_branch
          %166 = sbr.rel (%p164) target = $region32
        $region31: #{tpu_custom_call.1} parent=27 // pred_region
          %167 = dma.done %s160, 25088
        $region32: #{tpu_custom_call.1} parent=27 // pred_fallthru
          _
        %p168 = scmp.lt.s32.totalorder %s20, 0
        %s169 = scalar_select %p168, %s20, 0
        %s170 = smul.addr %s169, 224
        %s171 = smul.addr %s170, 4
        %s172 = scalar_lea.vmem %s0, %s171
        %p173 = pneg %p49
        %p174 = pneg %p46
        %s175 = sand.u32 %s62, 1
        %s176 = scalar_lea.sflag [#allocation3], %s175
        %s177 = sand.u32 %s62, 1
        %s178 = smul.addr %s177, 1568
        %s179 = scalar_lea.vmem [#allocation2], %s178
        %p180 = pneg %p75
        %p181 = pneg %p72
        %p182 = pneg %p103
        %p183 = pneg %p100
        %s184 = smul.u32 56, %s21
        %p185 = scmp.lt.s32.totalorder %s20, 0
        %s186 = scalar_select %p185, %s20, 0
        %p187 = scmp.lt.s32.totalorder %s184, 111
        %s188 = scalar_select %p187, %s184, 111
        %s189 = smul.addr %s188, 2
        %s190 = smul.addr %s186, 224
        %s191 = sadd.s32 %s189, %s190
        %s192 = smul.addr %s191, 8
        %s193 = scalar_lea.vmem %s2, %s192
        %p194 = scmp.lt.s32.totalorder %s20, 0
        %s195 = scalar_select %p194, %s20, 0
        %s196 = smul.addr %s195, 224
        %s197 = smul.addr %s196, 4
        %s198 = scalar_lea.vmem %s0, %s197
        %s199 = smul.u32 56, %s21
        %s200 = smul.u32 56, %s21
        %p201 = scmp.lt.s32.totalorder %s20, 0
        %s202 = scalar_select %p201, %s20, 0
        %p203 = scmp.lt.s32.totalorder %s200, 111
        %s204 = scalar_select %p203, %s200, 111
        %s205 = smul.addr %s204, 2
        %s206 = smul.addr %s202, 224
        %s207 = sadd.s32 %s205, %s206
        %s208 = smul.addr %s207, 8
        %s209 = scalar_lea.vmem %s2, %s208
        %s210 = smul.u32 56, %s21
        %v212 = vld [vmem:[%s198] sm:$0xff]
        %v213 = vld [vmem:[%s198 + $0x8] sm:$0xff]
        %v214 = vld [vmem:[%s198 + $0x10] sm:$0xff]
        %v215 = vld [vmem:[%s198 + $0x18] sm:$0xff]
        %v216 = vld [vmem:[%s198 + $0x20] sm:$0xff]
        %v217 = vld [vmem:[%s198 + $0x28] sm:$0xff]
        %v218 = vld [vmem:[%s198 + $0x30] sm:$0xff]
        %v219 = vld [vmem:[%s198 + $0x38] sm:$0xff]
        %v220 = vld [vmem:[%s198 + $0x40] sm:$0xff]
        %v221 = vld [vmem:[%s198 + $0x48] sm:$0xff]
        %v222 = vld [vmem:[%s198 + $0x50] sm:$0xff]
        %v223 = vld [vmem:[%s198 + $0x58] sm:$0xff]
        %v224 = vld [vmem:[%s198 + $0x60] sm:$0xff]
        %v225 = vld [vmem:[%s198 + $0x68] sm:$0xff]
        %v226 = vld [vmem:[%s198 + $0x70] sm:$0xff]
        %v227 = vld [vmem:[%s198 + $0x78] sm:$0xff]
        %v228 = vld [vmem:[%s198 + $0x80] sm:$0xff]
        %v229 = vld [vmem:[%s198 + $0x88] sm:$0xff]
        %v230 = vld [vmem:[%s198 + $0x90] sm:$0xff]
        %v231 = vld [vmem:[%s198 + $0x98] sm:$0xff]
        %v232 = vld [vmem:[%s198 + $0xa0] sm:$0xff]
        %v233 = vld [vmem:[%s198 + $0xa8] sm:$0xff]
        %v234 = vld [vmem:[%s198 + $0xb0] sm:$0xff]
        %v235 = vld [vmem:[%s198 + $0xb8] sm:$0xff]
        %v236 = vld [vmem:[%s198 + $0xc0] sm:$0xff]
        %v237 = vld [vmem:[%s198 + $0xc8] sm:$0xff]
        %v238 = vld [vmem:[%s198 + $0xd0] sm:$0xff]
        %v239 = vld [vmem:[%s198 + $0xd8] sm:$0xff]
        %v240 = vld [vmem:[%s198 + $0xe0] sm:$0xff]
        %v241 = vld [vmem:[%s198 + $0xe8] sm:$0xff]
        %v242 = vld [vmem:[%s198 + $0xf0] sm:$0xff]
        %v243 = vld [vmem:[%s198 + $0xf8] sm:$0xff]
        %v244 = vld [vmem:[%s198 + $0x100] sm:$0xff]
        %v245 = vld [vmem:[%s198 + $0x108] sm:$0xff]
        %v246 = vld [vmem:[%s198 + $0x110] sm:$0xff]
        %v247 = vld [vmem:[%s198 + $0x118] sm:$0xff]
        %v248 = vld [vmem:[%s198 + $0x120] sm:$0xff]
        %v249 = vld [vmem:[%s198 + $0x128] sm:$0xff]
        %v250 = vld [vmem:[%s198 + $0x130] sm:$0xff]
        %v251 = vld [vmem:[%s198 + $0x138] sm:$0xff]
        %v252 = vld [vmem:[%s198 + $0x140] sm:$0xff]
        %v253 = vld [vmem:[%s198 + $0x148] sm:$0xff]
        %v254 = vld [vmem:[%s198 + $0x150] sm:$0xff]
        %v255 = vld [vmem:[%s198 + $0x158] sm:$0xff]
        %v256 = vld [vmem:[%s198 + $0x160] sm:$0xff]
        %v257 = vld [vmem:[%s198 + $0x168] sm:$0xff]
        %v258 = vld [vmem:[%s198 + $0x170] sm:$0xff]
        %v259 = vld [vmem:[%s198 + $0x178] sm:$0xff]
        %v260 = vld [vmem:[%s198 + $0x180] sm:$0xff]
        %v261 = vld [vmem:[%s198 + $0x188] sm:$0xff]
        %v262 = vld [vmem:[%s198 + $0x190] sm:$0xff]
        %v263 = vld [vmem:[%s198 + $0x198] sm:$0xff]
        %v264 = vld [vmem:[%s198 + $0x1a0] sm:$0xff]
        %v265 = vld [vmem:[%s198 + $0x1a8] sm:$0xff]
        %v266 = vld [vmem:[%s198 + $0x1b0] sm:$0xff]
        %v267 = vld [vmem:[%s198 + $0x1b8] sm:$0xff]
        %v268 = vld [vmem:[%s198 + $0x1c0] sm:$0xff]
        %v269 = vld [vmem:[%s198 + $0x1c8] sm:$0xff]
        %v270 = vld [vmem:[%s198 + $0x1d0] sm:$0xff]
        %v271 = vld [vmem:[%s198 + $0x1d8] sm:$0xff]
        %v272 = vld [vmem:[%s198 + $0x1e0] sm:$0xff]
        %v273 = vld [vmem:[%s198 + $0x1e8] sm:$0xff]
        %v274 = vld [vmem:[%s198 + $0x1f0] sm:$0xff]
        %v275 = vld [vmem:[%s198 + $0x1f8] sm:$0xff]
        %v276 = vld [vmem:[%s198 + $0x200] sm:$0xff]
        %v277 = vld [vmem:[%s198 + $0x208] sm:$0xff]
        %v278 = vld [vmem:[%s198 + $0x210] sm:$0xff]
        %v279 = vld [vmem:[%s198 + $0x218] sm:$0xff]
        %v280 = vld [vmem:[%s198 + $0x220] sm:$0xff]
        %v281 = vld [vmem:[%s198 + $0x228] sm:$0xff]
        %v282 = vld [vmem:[%s198 + $0x230] sm:$0xff]
        %v283 = vld [vmem:[%s198 + $0x238] sm:$0xff]
        %v284 = vld [vmem:[%s198 + $0x240] sm:$0xff]
        %v285 = vld [vmem:[%s198 + $0x248] sm:$0xff]
        %v286 = vld [vmem:[%s198 + $0x250] sm:$0xff]
        %v287 = vld [vmem:[%s198 + $0x258] sm:$0xff]
        %v288 = vld [vmem:[%s198 + $0x260] sm:$0xff]
        %v289 = vld [vmem:[%s198 + $0x268] sm:$0xff]
        %v290 = vld [vmem:[%s198 + $0x270] sm:$0xff]
        %v291 = vld [vmem:[%s198 + $0x278] sm:$0xff]
        %v292 = vld [vmem:[%s198 + $0x280] sm:$0xff]
        %v293 = vld [vmem:[%s198 + $0x288] sm:$0xff]
        %v294 = vld [vmem:[%s198 + $0x290] sm:$0xff]
        %v295 = vld [vmem:[%s198 + $0x298] sm:$0xff]
        %v296 = vld [vmem:[%s198 + $0x2a0] sm:$0xff]
        %v297 = vld [vmem:[%s198 + $0x2a8] sm:$0xff]
        %v298 = vld [vmem:[%s198 + $0x2b0] sm:$0xff]
        %v299 = vld [vmem:[%s198 + $0x2b8] sm:$0xff]
        %v300 = vld [vmem:[%s198 + $0x2c0] sm:$0xff]
        %v301 = vld [vmem:[%s198 + $0x2c8] sm:$0xff]
        %v302 = vld [vmem:[%s198 + $0x2d0] sm:$0xff]
        %v303 = vld [vmem:[%s198 + $0x2d8] sm:$0xff]
        %v304 = vld [vmem:[%s198 + $0x2e0] sm:$0xff]
        %v305 = vld [vmem:[%s198 + $0x2e8] sm:$0xff]
        %v306 = vld [vmem:[%s198 + $0x2f0] sm:$0xff]
        %v307 = vld [vmem:[%s198 + $0x2f8] sm:$0xff]
        %v308 = vld [vmem:[%s198 + $0x300] sm:$0xff]
        %v309 = vld [vmem:[%s198 + $0x308] sm:$0xff]
        %v310 = vld [vmem:[%s198 + $0x310] sm:$0xff]
        %v311 = vld [vmem:[%s198 + $0x318] sm:$0xff]
        %v312 = vld [vmem:[%s198 + $0x320] sm:$0xff]
        %v313 = vld [vmem:[%s198 + $0x328] sm:$0xff]
        %v314 = vld [vmem:[%s198 + $0x330] sm:$0xff]
        %v315 = vld [vmem:[%s198 + $0x338] sm:$0xff]
        %v316 = vld [vmem:[%s198 + $0x340] sm:$0xff]
        %v317 = vld [vmem:[%s198 + $0x348] sm:$0xff]
        %v318 = vld [vmem:[%s198 + $0x350] sm:$0xff]
        %v319 = vld [vmem:[%s198 + $0x358] sm:$0xff]
        %v320 = vld [vmem:[%s198 + $0x360] sm:$0xff]
        %v321 = vld [vmem:[%s198 + $0x368] sm:$0xff]
        %v322 = vld [vmem:[%s198 + $0x370] sm:$0xff]
        %v323 = vld [vmem:[%s198 + $0x378] sm:$0xff]
        %v324 = vmax.bf16 %v212, 0
        %v325 = vmax.bf16 %v213, 0
        %v326 = vmax.bf16 %v214, 0
        %v327 = vmax.bf16 %v215, 0
        %v328 = vmax.bf16 %v216, 0
        %v329 = vmax.bf16 %v217, 0
        %v330 = vmax.bf16 %v218, 0
        %v331 = vmax.bf16 %v219, 0
        %v332 = vmax.bf16 %v220, 0
        %v333 = vmax.bf16 %v221, 0
        %v334 = vmax.bf16 %v222, 0
        %v335 = vmax.bf16 %v223, 0
        %v336 = vmax.bf16 %v224, 0
        %v337 = vmax.bf16 %v225, 0
        %v338 = vmax.bf16 %v226, 0
        %v339 = vmax.bf16 %v227, 0
        %v340 = vmax.bf16 %v228, 0
        %v341 = vmax.bf16 %v229, 0
        %v342 = vmax.bf16 %v230, 0
        %v343 = vmax.bf16 %v231, 0
        %v344 = vmax.bf16 %v232, 0
        %v345 = vmax.bf16 %v233, 0
        %v346 = vmax.bf16 %v234, 0
        %v347 = vmax.bf16 %v235, 0
        %v348 = vmax.bf16 %v236, 0
        %v349 = vmax.bf16 %v237, 0
        %v350 = vmax.bf16 %v238, 0
        %v351 = vmax.bf16 %v239, 0
        %v352 = vmax.bf16 %v240, 0
        %v353 = vmax.bf16 %v241, 0
        %v354 = vmax.bf16 %v242, 0
        %v355 = vmax.bf16 %v243, 0
        %v356 = vmax.bf16 %v244, 0
        %v357 = vmax.bf16 %v245, 0
        %v358 = vmax.bf16 %v246, 0
        %v359 = vmax.bf16 %v247, 0
        %v360 = vmax.bf16 %v248, 0
        %v361 = vmax.bf16 %v249, 0
        %v362 = vmax.bf16 %v250, 0
        %v363 = vmax.bf16 %v251, 0
        %v364 = vmax.bf16 %v252, 0
        %v365 = vmax.bf16 %v253, 0
        %v366 = vmax.bf16 %v254, 0
        %v367 = vmax.bf16 %v255, 0
        %v368 = vmax.bf16 %v256, 0
        %v369 = vmax.bf16 %v257, 0
        %v370 = vmax.bf16 %v258, 0
        %v371 = vmax.bf16 %v259, 0
        %v372 = vmax.bf16 %v260, 0
        %v373 = vmax.bf16 %v261, 0
        %v374 = vmax.bf16 %v262, 0
        %v375 = vmax.bf16 %v263, 0
        %v376 = vmax.bf16 %v264, 0
        %v377 = vmax.bf16 %v265, 0
        %v378 = vmax.bf16 %v266, 0
        %v379 = vmax.bf16 %v267, 0
        %v380 = vmax.bf16 %v268, 0
        %v381 = vmax.bf16 %v269, 0
        %v382 = vmax.bf16 %v270, 0
        %v383 = vmax.bf16 %v271, 0
        %v384 = vmax.bf16 %v272, 0
        %v385 = vmax.bf16 %v273, 0
        %v386 = vmax.bf16 %v274, 0
        %v387 = vmax.bf16 %v275, 0
        %v388 = vmax.bf16 %v276, 0
        %v389 = vmax.bf16 %v277, 0
        %v390 = vmax.bf16 %v278, 0
        %v391 = vmax.bf16 %v279, 0
        %v392 = vmax.bf16 %v280, 0
        %v393 = vmax.bf16 %v281, 0
        %v394 = vmax.bf16 %v282, 0
        %v395 = vmax.bf16 %v283, 0
        %v396 = vmax.bf16 %v284, 0
        %v397 = vmax.bf16 %v285, 0
        %v398 = vmax.bf16 %v286, 0
        %v399 = vmax.bf16 %v287, 0
        %v400 = vmax.bf16 %v288, 0
        %v401 = vmax.bf16 %v289, 0
        %v402 = vmax.bf16 %v290, 0
        %v403 = vmax.bf16 %v291, 0
        %v404 = vmax.bf16 %v292, 0
        %v405 = vmax.bf16 %v293, 0
        %v406 = vmax.bf16 %v294, 0
        %v407 = vmax.bf16 %v295, 0
        %v408 = vmax.bf16 %v296, 0
        %v409 = vmax.bf16 %v297, 0
        %v410 = vmax.bf16 %v298, 0
        %v411 = vmax.bf16 %v299, 0
        %v412 = vmax.bf16 %v300, 0
        %v413 = vmax.bf16 %v301, 0
        %v414 = vmax.bf16 %v302, 0
        %v415 = vmax.bf16 %v303, 0
        %v416 = vmax.bf16 %v304, 0
        %v417 = vmax.bf16 %v305, 0
        %v418 = vmax.bf16 %v306, 0
        %v419 = vmax.bf16 %v307, 0
        %v420 = vmax.bf16 %v308, 0
        %v421 = vmax.bf16 %v309, 0
        %v422 = vmax.bf16 %v310, 0
        %v423 = vmax.bf16 %v311, 0
        %v424 = vmax.bf16 %v312, 0
        %v425 = vmax.bf16 %v313, 0
        %v426 = vmax.bf16 %v314, 0
        %v427 = vmax.bf16 %v315, 0
        %v428 = vmax.bf16 %v316, 0
        %v429 = vmax.bf16 %v317, 0
        %v430 = vmax.bf16 %v318, 0
        %v431 = vmax.bf16 %v319, 0
        %v432 = vmax.bf16 %v320, 0
        %v433 = vmax.bf16 %v321, 0
        %v434 = vmax.bf16 %v322, 0
        %v435 = vmax.bf16 %v323, 0
        %v436 = vld [vmem:[%s163] sm:$0xff]
        %v437 = vld [vmem:[%s163 + $0x8] sm:$0xff]
        %v438 = vld [vmem:[%s163 + $0x10] sm:$0xff]
        %v439 = vld [vmem:[%s163 + $0x18] sm:$0xf]
        %v440 = vld [vmem:[%s163 + $0x1c] sm:$0xff]
        %v441 = vld [vmem:[%s163 + $0x24] sm:$0xff]
        %v442 = vld [vmem:[%s163 + $0x2c] sm:$0xff]
        %v443 = vld [vmem:[%s163 + $0x34] sm:$0xf]
        %v444 = vld [vmem:[%s163 + $0x38] sm:$0xff]
        %v445 = vld [vmem:[%s163 + $0x40] sm:$0xff]
        %v446 = vld [vmem:[%s163 + $0x48] sm:$0xff]
        %v447 = vld [vmem:[%s163 + $0x50] sm:$0xf]
        %v448 = vld [vmem:[%s163 + $0x54] sm:$0xff]
        %v449 = vld [vmem:[%s163 + $0x5c] sm:$0xff]
        %v450 = vld [vmem:[%s163 + $0x64] sm:$0xff]
        %v451 = vld [vmem:[%s163 + $0x6c] sm:$0xf]
        %v452 = vld [vmem:[%s163 + $0x70] sm:$0xff]
        %v453 = vld [vmem:[%s163 + $0x78] sm:$0xff]
        %v454 = vld [vmem:[%s163 + $0x80] sm:$0xff]
        %v455 = vld [vmem:[%s163 + $0x88] sm:$0xf]
        %v456 = vld [vmem:[%s163 + $0x8c] sm:$0xff]
        %v457 = vld [vmem:[%s163 + $0x94] sm:$0xff]
        %v458 = vld [vmem:[%s163 + $0x9c] sm:$0xff]
        %v459 = vld [vmem:[%s163 + $0xa4] sm:$0xf]
        %v460 = vld [vmem:[%s163 + $0xa8] sm:$0xff]
        %v461 = vld [vmem:[%s163 + $0xb0] sm:$0xff]
        %v462 = vld [vmem:[%s163 + $0xb8] sm:$0xff]
        %v463 = vld [vmem:[%s163 + $0xc0] sm:$0xf]
        %v464 = vld [vmem:[%s163 + $0xc4] sm:$0xff]
        %v465 = vld [vmem:[%s163 + $0xcc] sm:$0xff]
        %v466 = vld [vmem:[%s163 + $0xd4] sm:$0xff]
        %v467 = vld [vmem:[%s163 + $0xdc] sm:$0xf]
        %v468 = vld [vmem:[%s163 + $0xe0] sm:$0xff]
        %v469 = vld [vmem:[%s163 + $0xe8] sm:$0xff]
        %v470 = vld [vmem:[%s163 + $0xf0] sm:$0xff]
        %v471 = vld [vmem:[%s163 + $0xf8] sm:$0xf]
        %v472 = vld [vmem:[%s163 + $0xfc] sm:$0xff]
        %v473 = vld [vmem:[%s163 + $0x104] sm:$0xff]
        %v474 = vld [vmem:[%s163 + $0x10c] sm:$0xff]
        %v475 = vld [vmem:[%s163 + $0x114] sm:$0xf]
        %v476 = vld [vmem:[%s163 + $0x118] sm:$0xff]
        %v477 = vld [vmem:[%s163 + $0x120] sm:$0xff]
        %v478 = vld [vmem:[%s163 + $0x128] sm:$0xff]
        %v479 = vld [vmem:[%s163 + $0x130] sm:$0xf]
        %v480 = vld [vmem:[%s163 + $0x134] sm:$0xff]
        %v481 = vld [vmem:[%s163 + $0x13c] sm:$0xff]
        %v482 = vld [vmem:[%s163 + $0x144] sm:$0xff]
        %v483 = vld [vmem:[%s163 + $0x14c] sm:$0xf]
        %v484 = vld [vmem:[%s163 + $0x150] sm:$0xff]
        %v485 = vld [vmem:[%s163 + $0x158] sm:$0xff]
        %v486 = vld [vmem:[%s163 + $0x160] sm:$0xff]
        %v487 = vld [vmem:[%s163 + $0x168] sm:$0xf]
        %v488 = vld [vmem:[%s163 + $0x16c] sm:$0xff]
        %v489 = vld [vmem:[%s163 + $0x174] sm:$0xff]
        %v490 = vld [vmem:[%s163 + $0x17c] sm:$0xff]
        %v491 = vld [vmem:[%s163 + $0x184] sm:$0xf]
        %v492 = vld [vmem:[%s163 + $0x188] sm:$0xff]
        %v493 = vld [vmem:[%s163 + $0x190] sm:$0xff]
        %v494 = vld [vmem:[%s163 + $0x198] sm:$0xff]
        %v495 = vld [vmem:[%s163 + $0x1a0] sm:$0xf]
        %v496 = vld [vmem:[%s163 + $0x1a4] sm:$0xff]
        %v497 = vld [vmem:[%s163 + $0x1ac] sm:$0xff]
        %v498 = vld [vmem:[%s163 + $0x1b4] sm:$0xff]
        %v499 = vld [vmem:[%s163 + $0x1bc] sm:$0xf]
        %v500 = vld [vmem:[%s163 + $0x1c0] sm:$0xff]
        %v501 = vld [vmem:[%s163 + $0x1c8] sm:$0xff]
        %v502 = vld [vmem:[%s163 + $0x1d0] sm:$0xff]
        %v503 = vld [vmem:[%s163 + $0x1d8] sm:$0xf]
        %v504 = vld [vmem:[%s163 + $0x1dc] sm:$0xff]
        %v505 = vld [vmem:[%s163 + $0x1e4] sm:$0xff]
        %v506 = vld [vmem:[%s163 + $0x1ec] sm:$0xff]
        %v507 = vld [vmem:[%s163 + $0x1f4] sm:$0xf]
        %v508 = vld [vmem:[%s163 + $0x1f8] sm:$0xff]
        %v509 = vld [vmem:[%s163 + $0x200] sm:$0xff]
        %v510 = vld [vmem:[%s163 + $0x208] sm:$0xff]
        %v511 = vld [vmem:[%s163 + $0x210] sm:$0xf]
        %v512 = vld [vmem:[%s163 + $0x214] sm:$0xff]
        %v513 = vld [vmem:[%s163 + $0x21c] sm:$0xff]
        %v514 = vld [vmem:[%s163 + $0x224] sm:$0xff]
        %v515 = vld [vmem:[%s163 + $0x22c] sm:$0xf]
        %v516 = vld [vmem:[%s163 + $0x230] sm:$0xff]
        %v517 = vld [vmem:[%s163 + $0x238] sm:$0xff]
        %v518 = vld [vmem:[%s163 + $0x240] sm:$0xff]
        %v519 = vld [vmem:[%s163 + $0x248] sm:$0xf]
        %v520 = vld [vmem:[%s163 + $0x24c] sm:$0xff]
        %v521 = vld [vmem:[%s163 + $0x254] sm:$0xff]
        %v522 = vld [vmem:[%s163 + $0x25c] sm:$0xff]
        %v523 = vld [vmem:[%s163 + $0x264] sm:$0xf]
        %v524 = vld [vmem:[%s163 + $0x268] sm:$0xff]
        %v525 = vld [vmem:[%s163 + $0x270] sm:$0xff]
        %v526 = vld [vmem:[%s163 + $0x278] sm:$0xff]
        %v527 = vld [vmem:[%s163 + $0x280] sm:$0xf]
        %v528 = vld [vmem:[%s163 + $0x284] sm:$0xff]
        %v529 = vld [vmem:[%s163 + $0x28c] sm:$0xff]
        %v530 = vld [vmem:[%s163 + $0x294] sm:$0xff]
        %v531 = vld [vmem:[%s163 + $0x29c] sm:$0xf]
        %v532 = vld [vmem:[%s163 + $0x2a0] sm:$0xff]
        %v533 = vld [vmem:[%s163 + $0x2a8] sm:$0xff]
        %v534 = vld [vmem:[%s163 + $0x2b0] sm:$0xff]
        %v535 = vld [vmem:[%s163 + $0x2b8] sm:$0xf]
        %v536 = vld [vmem:[%s163 + $0x2bc] sm:$0xff]
        %v537 = vld [vmem:[%s163 + $0x2c4] sm:$0xff]
        %v538 = vld [vmem:[%s163 + $0x2cc] sm:$0xff]
        %v539 = vld [vmem:[%s163 + $0x2d4] sm:$0xf]
        %v540 = vld [vmem:[%s163 + $0x2d8] sm:$0xff]
        %v541 = vld [vmem:[%s163 + $0x2e0] sm:$0xff]
        %v542 = vld [vmem:[%s163 + $0x2e8] sm:$0xff]
        %v543 = vld [vmem:[%s163 + $0x2f0] sm:$0xf]
        %v544 = vld [vmem:[%s163 + $0x2f4] sm:$0xff]
        %v545 = vld [vmem:[%s163 + $0x2fc] sm:$0xff]
        %v546 = vld [vmem:[%s163 + $0x304] sm:$0xff]
        %v547 = vld [vmem:[%s163 + $0x30c] sm:$0xf]
        %v548 = vld [vmem:[%s163 + $0x310] sm:$0xff]
        %v549 = vld [vmem:[%s163 + $0x318] sm:$0xff]
        %v550 = vld [vmem:[%s163 + $0x320] sm:$0xff]
        %v551 = vld [vmem:[%s163 + $0x328] sm:$0xf]
        %v552 = vld [vmem:[%s163 + $0x32c] sm:$0xff]
        %v553 = vld [vmem:[%s163 + $0x334] sm:$0xff]
        %v554 = vld [vmem:[%s163 + $0x33c] sm:$0xff]
        %v555 = vld [vmem:[%s163 + $0x344] sm:$0xf]
        %v556 = vld [vmem:[%s163 + $0x348] sm:$0xff]
        %v557 = vld [vmem:[%s163 + $0x350] sm:$0xff]
        %v558 = vld [vmem:[%s163 + $0x358] sm:$0xff]
        %v559 = vld [vmem:[%s163 + $0x360] sm:$0xf]
        %v560 = vld [vmem:[%s163 + $0x364] sm:$0xff]
        %v561 = vld [vmem:[%s163 + $0x36c] sm:$0xff]
        %v562 = vld [vmem:[%s163 + $0x374] sm:$0xff]
        %v563 = vld [vmem:[%s163 + $0x37c] sm:$0xf]
        %v564 = vld [vmem:[%s163 + $0x380] sm:$0xff]
        %v565 = vld [vmem:[%s163 + $0x388] sm:$0xff]
        %v566 = vld [vmem:[%s163 + $0x390] sm:$0xff]
        %v567 = vld [vmem:[%s163 + $0x398] sm:$0xf]
        %v568 = vld [vmem:[%s163 + $0x39c] sm:$0xff]
        %v569 = vld [vmem:[%s163 + $0x3a4] sm:$0xff]
        %v570 = vld [vmem:[%s163 + $0x3ac] sm:$0xff]
        %v571 = vld [vmem:[%s163 + $0x3b4] sm:$0xf]
        %v572 = vld [vmem:[%s163 + $0x3b8] sm:$0xff]
        %v573 = vld [vmem:[%s163 + $0x3c0] sm:$0xff]
        %v574 = vld [vmem:[%s163 + $0x3c8] sm:$0xff]
        %v575 = vld [vmem:[%s163 + $0x3d0] sm:$0xf]
        %v576 = vld [vmem:[%s163 + $0x3d4] sm:$0xff]
        %v577 = vld [vmem:[%s163 + $0x3dc] sm:$0xff]
        %v578 = vld [vmem:[%s163 + $0x3e4] sm:$0xff]
        %v579 = vld [vmem:[%s163 + $0x3ec] sm:$0xf]
        %v580 = vld [vmem:[%s163 + $0x3f0] sm:$0xff]
        %v581 = vld [vmem:[%s163 + $0x3f8] sm:$0xff]
        %v582 = vld [vmem:[%s163 + $0x400] sm:$0xff]
        %v583 = vld [vmem:[%s163 + $0x408] sm:$0xf]
        %v584 = vld [vmem:[%s163 + $0x40c] sm:$0xff]
        %v585 = vld [vmem:[%s163 + $0x414] sm:$0xff]
        %v586 = vld [vmem:[%s163 + $0x41c] sm:$0xff]
        %v587 = vld [vmem:[%s163 + $0x424] sm:$0xf]
        %v588 = vld [vmem:[%s163 + $0x428] sm:$0xff]
        %v589 = vld [vmem:[%s163 + $0x430] sm:$0xff]
        %v590 = vld [vmem:[%s163 + $0x438] sm:$0xff]
        %v591 = vld [vmem:[%s163 + $0x440] sm:$0xf]
        %v592 = vld [vmem:[%s163 + $0x444] sm:$0xff]
        %v593 = vld [vmem:[%s163 + $0x44c] sm:$0xff]
        %v594 = vld [vmem:[%s163 + $0x454] sm:$0xff]
        %v595 = vld [vmem:[%s163 + $0x45c] sm:$0xf]
        %v596 = vld [vmem:[%s163 + $0x460] sm:$0xff]
        %v597 = vld [vmem:[%s163 + $0x468] sm:$0xff]
        %v598 = vld [vmem:[%s163 + $0x470] sm:$0xff]
        %v599 = vld [vmem:[%s163 + $0x478] sm:$0xf]
        %v600 = vld [vmem:[%s163 + $0x47c] sm:$0xff]
        %v601 = vld [vmem:[%s163 + $0x484] sm:$0xff]
        %v602 = vld [vmem:[%s163 + $0x48c] sm:$0xff]
        %v603 = vld [vmem:[%s163 + $0x494] sm:$0xf]
        %v604 = vld [vmem:[%s163 + $0x498] sm:$0xff]
        %v605 = vld [vmem:[%s163 + $0x4a0] sm:$0xff]
        %v606 = vld [vmem:[%s163 + $0x4a8] sm:$0xff]
        %v607 = vld [vmem:[%s163 + $0x4b0] sm:$0xf]
        %v608 = vld [vmem:[%s163 + $0x4b4] sm:$0xff]
        %v609 = vld [vmem:[%s163 + $0x4bc] sm:$0xff]
        %v610 = vld [vmem:[%s163 + $0x4c4] sm:$0xff]
        %v611 = vld [vmem:[%s163 + $0x4cc] sm:$0xf]
        %v612 = vld [vmem:[%s163 + $0x4d0] sm:$0xff]
        %v613 = vld [vmem:[%s163 + $0x4d8] sm:$0xff]
        %v614 = vld [vmem:[%s163 + $0x4e0] sm:$0xff]
        %v615 = vld [vmem:[%s163 + $0x4e8] sm:$0xf]
        %v616 = vld [vmem:[%s163 + $0x4ec] sm:$0xff]
        %v617 = vld [vmem:[%s163 + $0x4f4] sm:$0xff]
        %v618 = vld [vmem:[%s163 + $0x4fc] sm:$0xff]
        %v619 = vld [vmem:[%s163 + $0x504] sm:$0xf]
        %v620 = vld [vmem:[%s163 + $0x508] sm:$0xff]
        %v621 = vld [vmem:[%s163 + $0x510] sm:$0xff]
        %v622 = vld [vmem:[%s163 + $0x518] sm:$0xff]
        %v623 = vld [vmem:[%s163 + $0x520] sm:$0xf]
        %v624 = vld [vmem:[%s163 + $0x524] sm:$0xff]
        %v625 = vld [vmem:[%s163 + $0x52c] sm:$0xff]
        %v626 = vld [vmem:[%s163 + $0x534] sm:$0xff]
        %v627 = vld [vmem:[%s163 + $0x53c] sm:$0xf]
        %v628 = vld [vmem:[%s163 + $0x540] sm:$0xff]
        %v629 = vld [vmem:[%s163 + $0x548] sm:$0xff]
        %v630 = vld [vmem:[%s163 + $0x550] sm:$0xff]
        %v631 = vld [vmem:[%s163 + $0x558] sm:$0xf]
        %v632 = vld [vmem:[%s163 + $0x55c] sm:$0xff]
        %v633 = vld [vmem:[%s163 + $0x564] sm:$0xff]
        %v634 = vld [vmem:[%s163 + $0x56c] sm:$0xff]
        %v635 = vld [vmem:[%s163 + $0x574] sm:$0xf]
        %v636 = vld [vmem:[%s163 + $0x578] sm:$0xff]
        %v637 = vld [vmem:[%s163 + $0x580] sm:$0xff]
        %v638 = vld [vmem:[%s163 + $0x588] sm:$0xff]
        %v639 = vld [vmem:[%s163 + $0x590] sm:$0xf]
        %v640 = vld [vmem:[%s163 + $0x594] sm:$0xff]
        %v641 = vld [vmem:[%s163 + $0x59c] sm:$0xff]
        %v642 = vld [vmem:[%s163 + $0x5a4] sm:$0xff]
        %v643 = vld [vmem:[%s163 + $0x5ac] sm:$0xf]
        %v644 = vld [vmem:[%s163 + $0x5b0] sm:$0xff]
        %v645 = vld [vmem:[%s163 + $0x5b8] sm:$0xff]
        %v646 = vld [vmem:[%s163 + $0x5c0] sm:$0xff]
        %v647 = vld [vmem:[%s163 + $0x5c8] sm:$0xf]
        %v648 = vld [vmem:[%s163 + $0x5cc] sm:$0xff]
        %v649 = vld [vmem:[%s163 + $0x5d4] sm:$0xff]
        %v650 = vld [vmem:[%s163 + $0x5dc] sm:$0xff]
        %v651 = vld [vmem:[%s163 + $0x5e4] sm:$0xf]
        %v652 = vld [vmem:[%s163 + $0x5e8] sm:$0xff]
        %v653 = vld [vmem:[%s163 + $0x5f0] sm:$0xff]
        %v654 = vld [vmem:[%s163 + $0x5f8] sm:$0xff]
        %v655 = vld [vmem:[%s163 + $0x600] sm:$0xf]
        %v656 = vld [vmem:[%s163 + $0x604] sm:$0xff]
        %v657 = vld [vmem:[%s163 + $0x60c] sm:$0xff]
        %v658 = vld [vmem:[%s163 + $0x614] sm:$0xff]
        %v659 = vld [vmem:[%s163 + $0x61c] sm:$0xf]
        %v884 = vunpack.c.l.b16 %v436
        %v885 = vunpack.c.h.b16 %v436
        %v886 = vunpack.c.l.b16 %v437
        %v887 = vunpack.c.h.b16 %v437
        %v888 = vunpack.c.l.b16 %v438
        %v889 = vunpack.c.h.b16 %v438
        %v890 = vunpack.c.l.b16 %v439
        %v891 = vunpack.c.l.b16 %v440
        %v892 = vunpack.c.h.b16 %v440
        %v893 = vunpack.c.l.b16 %v441
        %v894 = vunpack.c.h.b16 %v441
        %v895 = vunpack.c.l.b16 %v442
        %v896 = vunpack.c.h.b16 %v442
        %v897 = vunpack.c.l.b16 %v443
        %v898 = vunpack.c.l.b16 %v444
        %v899 = vunpack.c.h.b16 %v444
        %v900 = vunpack.c.l.b16 %v445
        %v901 = vunpack.c.h.b16 %v445
        %v902 = vunpack.c.l.b16 %v446
        %v903 = vunpack.c.h.b16 %v446
        %v904 = vunpack.c.l.b16 %v447
        %v905 = vunpack.c.l.b16 %v448
        %v906 = vunpack.c.h.b16 %v448
        %v907 = vunpack.c.l.b16 %v449
        %v908 = vunpack.c.h.b16 %v449
        %v909 = vunpack.c.l.b16 %v450
        %v910 = vunpack.c.h.b16 %v450
        %v911 = vunpack.c.l.b16 %v451
        %v912 = vunpack.c.l.b16 %v452
        %v913 = vunpack.c.h.b16 %v452
        %v914 = vunpack.c.l.b16 %v453
        %v915 = vunpack.c.h.b16 %v453
        %v916 = vunpack.c.l.b16 %v454
        %v917 = vunpack.c.h.b16 %v454
        %v918 = vunpack.c.l.b16 %v455
        %v919 = vunpack.c.l.b16 %v456
        %v920 = vunpack.c.h.b16 %v456
        %v921 = vunpack.c.l.b16 %v457
        %v922 = vunpack.c.h.b16 %v457
        %v923 = vunpack.c.l.b16 %v458
        %v924 = vunpack.c.h.b16 %v458
        %v925 = vunpack.c.l.b16 %v459
        %v926 = vunpack.c.l.b16 %v460
        %v927 = vunpack.c.h.b16 %v460
        %v928 = vunpack.c.l.b16 %v461
        %v929 = vunpack.c.h.b16 %v461
        %v930 = vunpack.c.l.b16 %v462
        %v931 = vunpack.c.h.b16 %v462
        %v932 = vunpack.c.l.b16 %v463
        %v933 = vunpack.c.l.b16 %v464
        %v934 = vunpack.c.h.b16 %v464
        %v935 = vunpack.c.l.b16 %v465
        %v936 = vunpack.c.h.b16 %v465
        %v937 = vunpack.c.l.b16 %v466
        %v938 = vunpack.c.h.b16 %v466
        %v939 = vunpack.c.l.b16 %v467
        %v940 = vunpack.c.l.b16 %v468
        %v941 = vunpack.c.h.b16 %v468
        %v942 = vunpack.c.l.b16 %v469
        %v943 = vunpack.c.h.b16 %v469
        %v944 = vunpack.c.l.b16 %v470
        %v945 = vunpack.c.h.b16 %v470
        %v946 = vunpack.c.l.b16 %v471
        %v947 = vunpack.c.l.b16 %v472
        %v948 = vunpack.c.h.b16 %v472
        %v949 = vunpack.c.l.b16 %v473
        %v950 = vunpack.c.h.b16 %v473
        %v951 = vunpack.c.l.b16 %v474
        %v952 = vunpack.c.h.b16 %v474
        %v953 = vunpack.c.l.b16 %v475
        %v954 = vunpack.c.l.b16 %v476
        %v955 = vunpack.c.h.b16 %v476
        %v956 = vunpack.c.l.b16 %v477
        %v957 = vunpack.c.h.b16 %v477
        %v958 = vunpack.c.l.b16 %v478
        %v959 = vunpack.c.h.b16 %v478
        %v960 = vunpack.c.l.b16 %v479
        %v961 = vunpack.c.l.b16 %v480
        %v962 = vunpack.c.h.b16 %v480
        %v963 = vunpack.c.l.b16 %v481
        %v964 = vunpack.c.h.b16 %v481
        %v965 = vunpack.c.l.b16 %v482
        %v966 = vunpack.c.h.b16 %v482
        %v967 = vunpack.c.l.b16 %v483
        %v968 = vunpack.c.l.b16 %v484
        %v969 = vunpack.c.h.b16 %v484
        %v970 = vunpack.c.l.b16 %v485
        %v971 = vunpack.c.h.b16 %v485
        %v972 = vunpack.c.l.b16 %v486
        %v973 = vunpack.c.h.b16 %v486
        %v974 = vunpack.c.l.b16 %v487
        %v975 = vunpack.c.l.b16 %v488
        %v976 = vunpack.c.h.b16 %v488
        %v977 = vunpack.c.l.b16 %v489
        %v978 = vunpack.c.h.b16 %v489
        %v979 = vunpack.c.l.b16 %v490
        %v980 = vunpack.c.h.b16 %v490
        %v981 = vunpack.c.l.b16 %v491
        %v982 = vunpack.c.l.b16 %v492
        %v983 = vunpack.c.h.b16 %v492
        %v984 = vunpack.c.l.b16 %v493
        %v985 = vunpack.c.h.b16 %v493
        %v986 = vunpack.c.l.b16 %v494
        %v987 = vunpack.c.h.b16 %v494
        %v988 = vunpack.c.l.b16 %v495
        %v989 = vunpack.c.l.b16 %v496
        %v990 = vunpack.c.h.b16 %v496
        %v991 = vunpack.c.l.b16 %v497
        %v992 = vunpack.c.h.b16 %v497
        %v993 = vunpack.c.l.b16 %v498
        %v994 = vunpack.c.h.b16 %v498
        %v995 = vunpack.c.l.b16 %v499
        %v996 = vunpack.c.l.b16 %v500
        %v997 = vunpack.c.h.b16 %v500
        %v998 = vunpack.c.l.b16 %v501
        %v999 = vunpack.c.h.b16 %v501
        %v1000 = vunpack.c.l.b16 %v502
        %v1001 = vunpack.c.h.b16 %v502
        %v1002 = vunpack.c.l.b16 %v503
        %v1003 = vunpack.c.l.b16 %v504
        %v1004 = vunpack.c.h.b16 %v504
        %v1005 = vunpack.c.l.b16 %v505
        %v1006 = vunpack.c.h.b16 %v505
        %v1007 = vunpack.c.l.b16 %v506
        %v1008 = vunpack.c.h.b16 %v506
        %v1009 = vunpack.c.l.b16 %v507
        %v1010 = vunpack.c.l.b16 %v508
        %v1011 = vunpack.c.h.b16 %v508
        %v1012 = vunpack.c.l.b16 %v509
        %v1013 = vunpack.c.h.b16 %v509
        %v1014 = vunpack.c.l.b16 %v510
        %v1015 = vunpack.c.h.b16 %v510
        %v1016 = vunpack.c.l.b16 %v511
        %v1017 = vunpack.c.l.b16 %v512
        %v1018 = vunpack.c.h.b16 %v512
        %v1019 = vunpack.c.l.b16 %v513
        %v1020 = vunpack.c.h.b16 %v513
        %v1021 = vunpack.c.l.b16 %v514
        %v1022 = vunpack.c.h.b16 %v514
        %v1023 = vunpack.c.l.b16 %v515
        %v1024 = vunpack.c.l.b16 %v516
        %v1025 = vunpack.c.h.b16 %v516
        %v1026 = vunpack.c.l.b16 %v517
        %v1027 = vunpack.c.h.b16 %v517
        %v1028 = vunpack.c.l.b16 %v518
        %v1029 = vunpack.c.h.b16 %v518
        %v1030 = vunpack.c.l.b16 %v519
        %v1031 = vunpack.c.l.b16 %v520
        %v1032 = vunpack.c.h.b16 %v520
        %v1033 = vunpack.c.l.b16 %v521
        %v1034 = vunpack.c.h.b16 %v521
        %v1035 = vunpack.c.l.b16 %v522
        %v1036 = vunpack.c.h.b16 %v522
        %v1037 = vunpack.c.l.b16 %v523
        %v1038 = vunpack.c.l.b16 %v524
        %v1039 = vunpack.c.h.b16 %v524
        %v1040 = vunpack.c.l.b16 %v525
        %v1041 = vunpack.c.h.b16 %v525
        %v1042 = vunpack.c.l.b16 %v526
        %v1043 = vunpack.c.h.b16 %v526
        %v1044 = vunpack.c.l.b16 %v527
        %v1045 = vunpack.c.l.b16 %v528
        %v1046 = vunpack.c.h.b16 %v528
        %v1047 = vunpack.c.l.b16 %v529
        %v1048 = vunpack.c.h.b16 %v529
        %v1049 = vunpack.c.l.b16 %v530
        %v1050 = vunpack.c.h.b16 %v530
        %v1051 = vunpack.c.l.b16 %v531
        %v1052 = vunpack.c.l.b16 %v532
        %v1053 = vunpack.c.h.b16 %v532
        %v1054 = vunpack.c.l.b16 %v533
        %v1055 = vunpack.c.h.b16 %v533
        %v1056 = vunpack.c.l.b16 %v534
        %v1057 = vunpack.c.h.b16 %v534
        %v1058 = vunpack.c.l.b16 %v535
        %v1059 = vunpack.c.l.b16 %v536
        %v1060 = vunpack.c.h.b16 %v536
        %v1061 = vunpack.c.l.b16 %v537
        %v1062 = vunpack.c.h.b16 %v537
        %v1063 = vunpack.c.l.b16 %v538
        %v1064 = vunpack.c.h.b16 %v538
        %v1065 = vunpack.c.l.b16 %v539
        %v1066 = vunpack.c.l.b16 %v540
        %v1067 = vunpack.c.h.b16 %v540
        %v1068 = vunpack.c.l.b16 %v541
        %v1069 = vunpack.c.h.b16 %v541
        %v1070 = vunpack.c.l.b16 %v542
        %v1071 = vunpack.c.h.b16 %v542
        %v1072 = vunpack.c.l.b16 %v543
        %v1073 = vunpack.c.l.b16 %v544
        %v1074 = vunpack.c.h.b16 %v544
        %v1075 = vunpack.c.l.b16 %v545
        %v1076 = vunpack.c.h.b16 %v545
        %v1077 = vunpack.c.l.b16 %v546
        %v1078 = vunpack.c.h.b16 %v546
        %v1079 = vunpack.c.l.b16 %v547
        %v1080 = vunpack.c.l.b16 %v548
        %v1081 = vunpack.c.h.b16 %v548
        %v1082 = vunpack.c.l.b16 %v549
        %v1083 = vunpack.c.h.b16 %v549
        %v1084 = vunpack.c.l.b16 %v550
        %v1085 = vunpack.c.h.b16 %v550
        %v1086 = vunpack.c.l.b16 %v551
        %v1087 = vunpack.c.l.b16 %v552
        %v1088 = vunpack.c.h.b16 %v552
        %v1089 = vunpack.c.l.b16 %v553
        %v1090 = vunpack.c.h.b16 %v553
        %v1091 = vunpack.c.l.b16 %v554
        %v1092 = vunpack.c.h.b16 %v554
        %v1093 = vunpack.c.l.b16 %v555
        %v1094 = vunpack.c.l.b16 %v556
        %v1095 = vunpack.c.h.b16 %v556
        %v1096 = vunpack.c.l.b16 %v557
        %v1097 = vunpack.c.h.b16 %v557
        %v1098 = vunpack.c.l.b16 %v558
        %v1099 = vunpack.c.h.b16 %v558
        %v1100 = vunpack.c.l.b16 %v559
        %v1101 = vunpack.c.l.b16 %v560
        %v1102 = vunpack.c.h.b16 %v560
        %v1103 = vunpack.c.l.b16 %v561
        %v1104 = vunpack.c.h.b16 %v561
        %v1105 = vunpack.c.l.b16 %v562
        %v1106 = vunpack.c.h.b16 %v562
        %v1107 = vunpack.c.l.b16 %v563
        %v1108 = vunpack.c.l.b16 %v564
        %v1109 = vunpack.c.h.b16 %v564
        %v1110 = vunpack.c.l.b16 %v565
        %v1111 = vunpack.c.h.b16 %v565
        %v1112 = vunpack.c.l.b16 %v566
        %v1113 = vunpack.c.h.b16 %v566
        %v1114 = vunpack.c.l.b16 %v567
        %v1115 = vunpack.c.l.b16 %v568
        %v1116 = vunpack.c.h.b16 %v568
        %v1117 = vunpack.c.l.b16 %v569
        %v1118 = vunpack.c.h.b16 %v569
        %v1119 = vunpack.c.l.b16 %v570
        %v1120 = vunpack.c.h.b16 %v570
        %v1121 = vunpack.c.l.b16 %v571
        %v1122 = vunpack.c.l.b16 %v572
        %v1123 = vunpack.c.h.b16 %v572
        %v1124 = vunpack.c.l.b16 %v573
        %v1125 = vunpack.c.h.b16 %v573
        %v1126 = vunpack.c.l.b16 %v574
        %v1127 = vunpack.c.h.b16 %v574
        %v1128 = vunpack.c.l.b16 %v575
        %v1129 = vunpack.c.l.b16 %v576
        %v1130 = vunpack.c.h.b16 %v576
        %v1131 = vunpack.c.l.b16 %v577
        %v1132 = vunpack.c.h.b16 %v577
        %v1133 = vunpack.c.l.b16 %v578
        %v1134 = vunpack.c.h.b16 %v578
        %v1135 = vunpack.c.l.b16 %v579
        %v1136 = vunpack.c.l.b16 %v580
        %v1137 = vunpack.c.h.b16 %v580
        %v1138 = vunpack.c.l.b16 %v581
        %v1139 = vunpack.c.h.b16 %v581
        %v1140 = vunpack.c.l.b16 %v582
        %v1141 = vunpack.c.h.b16 %v582
        %v1142 = vunpack.c.l.b16 %v583
        %v1143 = vunpack.c.l.b16 %v584
        %v1144 = vunpack.c.h.b16 %v584
        %v1145 = vunpack.c.l.b16 %v585
        %v1146 = vunpack.c.h.b16 %v585
        %v1147 = vunpack.c.l.b16 %v586
        %v1148 = vunpack.c.h.b16 %v586
        %v1149 = vunpack.c.l.b16 %v587
        %v1150 = vunpack.c.l.b16 %v588
        %v1151 = vunpack.c.h.b16 %v588
        %v1152 = vunpack.c.l.b16 %v589
        %v1153 = vunpack.c.h.b16 %v589
        %v1154 = vunpack.c.l.b16 %v590
        %v1155 = vunpack.c.h.b16 %v590
        %v1156 = vunpack.c.l.b16 %v591
        %v1157 = vunpack.c.l.b16 %v592
        %v1158 = vunpack.c.h.b16 %v592
        %v1159 = vunpack.c.l.b16 %v593
        %v1160 = vunpack.c.h.b16 %v593
        %v1161 = vunpack.c.l.b16 %v594
        %v1162 = vunpack.c.h.b16 %v594
        %v1163 = vunpack.c.l.b16 %v595
        %v1164 = vunpack.c.l.b16 %v596
        %v1165 = vunpack.c.h.b16 %v596
        %v1166 = vunpack.c.l.b16 %v597
        %v1167 = vunpack.c.h.b16 %v597
        %v1168 = vunpack.c.l.b16 %v598
        %v1169 = vunpack.c.h.b16 %v598
        %v1170 = vunpack.c.l.b16 %v599
        %v1171 = vunpack.c.l.b16 %v600
        %v1172 = vunpack.c.h.b16 %v600
        %v1173 = vunpack.c.l.b16 %v601
        %v1174 = vunpack.c.h.b16 %v601
        %v1175 = vunpack.c.l.b16 %v602
        %v1176 = vunpack.c.h.b16 %v602
        %v1177 = vunpack.c.l.b16 %v603
        %v1178 = vunpack.c.l.b16 %v604
        %v1179 = vunpack.c.h.b16 %v604
        %v1180 = vunpack.c.l.b16 %v605
        %v1181 = vunpack.c.h.b16 %v605
        %v1182 = vunpack.c.l.b16 %v606
        %v1183 = vunpack.c.h.b16 %v606
        %v1184 = vunpack.c.l.b16 %v607
        %v1185 = vunpack.c.l.b16 %v608
        %v1186 = vunpack.c.h.b16 %v608
        %v1187 = vunpack.c.l.b16 %v609
        %v1188 = vunpack.c.h.b16 %v609
        %v1189 = vunpack.c.l.b16 %v610
        %v1190 = vunpack.c.h.b16 %v610
        %v1191 = vunpack.c.l.b16 %v611
        %v1192 = vunpack.c.l.b16 %v612
        %v1193 = vunpack.c.h.b16 %v612
        %v1194 = vunpack.c.l.b16 %v613
        %v1195 = vunpack.c.h.b16 %v613
        %v1196 = vunpack.c.l.b16 %v614
        %v1197 = vunpack.c.h.b16 %v614
        %v1198 = vunpack.c.l.b16 %v615
        %v1199 = vunpack.c.l.b16 %v616
        %v1200 = vunpack.c.h.b16 %v616
        %v1201 = vunpack.c.l.b16 %v617
        %v1202 = vunpack.c.h.b16 %v617
        %v1203 = vunpack.c.l.b16 %v618
        %v1204 = vunpack.c.h.b16 %v618
        %v1205 = vunpack.c.l.b16 %v619
        %v1206 = vunpack.c.l.b16 %v620
        %v1207 = vunpack.c.h.b16 %v620
        %v1208 = vunpack.c.l.b16 %v621
        %v1209 = vunpack.c.h.b16 %v621
        %v1210 = vunpack.c.l.b16 %v622
        %v1211 = vunpack.c.h.b16 %v622
        %v1212 = vunpack.c.l.b16 %v623
        %v1213 = vunpack.c.l.b16 %v624
        %v1214 = vunpack.c.h.b16 %v624
        %v1215 = vunpack.c.l.b16 %v625
        %v1216 = vunpack.c.h.b16 %v625
        %v1217 = vunpack.c.l.b16 %v626
        %v1218 = vunpack.c.h.b16 %v626
        %v1219 = vunpack.c.l.b16 %v627
        %v1220 = vunpack.c.l.b16 %v628
        %v1221 = vunpack.c.h.b16 %v628
        %v1222 = vunpack.c.l.b16 %v629
        %v1223 = vunpack.c.h.b16 %v629
        %v1224 = vunpack.c.l.b16 %v630
        %v1225 = vunpack.c.h.b16 %v630
        %v1226 = vunpack.c.l.b16 %v631
        %v1227 = vunpack.c.l.b16 %v632
        %v1228 = vunpack.c.h.b16 %v632
        %v1229 = vunpack.c.l.b16 %v633
        %v1230 = vunpack.c.h.b16 %v633
        %v1231 = vunpack.c.l.b16 %v634
        %v1232 = vunpack.c.h.b16 %v634
        %v1233 = vunpack.c.l.b16 %v635
        %v1234 = vunpack.c.l.b16 %v636
        %v1235 = vunpack.c.h.b16 %v636
        %v1236 = vunpack.c.l.b16 %v637
        %v1237 = vunpack.c.h.b16 %v637
        %v1238 = vunpack.c.l.b16 %v638
        %v1239 = vunpack.c.h.b16 %v638
        %v1240 = vunpack.c.l.b16 %v639
        %v1241 = vunpack.c.l.b16 %v640
        %v1242 = vunpack.c.h.b16 %v640
        %v1243 = vunpack.c.l.b16 %v641
        %v1244 = vunpack.c.h.b16 %v641
        %v1245 = vunpack.c.l.b16 %v642
        %v1246 = vunpack.c.h.b16 %v642
        %v1247 = vunpack.c.l.b16 %v643
        %v1248 = vunpack.c.l.b16 %v644
        %v1249 = vunpack.c.h.b16 %v644
        %v1250 = vunpack.c.l.b16 %v645
        %v1251 = vunpack.c.h.b16 %v645
        %v1252 = vunpack.c.l.b16 %v646
        %v1253 = vunpack.c.h.b16 %v646
        %v1254 = vunpack.c.l.b16 %v647
        %v1255 = vunpack.c.l.b16 %v648
        %v1256 = vunpack.c.h.b16 %v648
        %v1257 = vunpack.c.l.b16 %v649
        %v1258 = vunpack.c.h.b16 %v649
        %v1259 = vunpack.c.l.b16 %v650
        %v1260 = vunpack.c.h.b16 %v650
        %v1261 = vunpack.c.l.b16 %v651
        %v1262 = vunpack.c.l.b16 %v652
        %v1263 = vunpack.c.h.b16 %v652
        %v1264 = vunpack.c.l.b16 %v653
        %v1265 = vunpack.c.h.b16 %v653
        %v1266 = vunpack.c.l.b16 %v654
        %v1267 = vunpack.c.h.b16 %v654
        %v1268 = vunpack.c.l.b16 %v655
        %v1269 = vunpack.c.l.b16 %v656
        %v1270 = vunpack.c.h.b16 %v656
        %v1271 = vunpack.c.l.b16 %v657
        %v1272 = vunpack.c.h.b16 %v657
        %v1273 = vunpack.c.l.b16 %v658
        %v1274 = vunpack.c.h.b16 %v658
        %v1275 = vunpack.c.l.b16 %v659
        %v1276 = vpack.c.b16 %v891, %v884
        %v1277 = vpack.c.b16 %v892, %v885
        %v1278 = vpack.c.b16 %v893, %v886
        %v1279 = vpack.c.b16 %v894, %v887
        %v1280 = vpack.c.b16 %v895, %v888
        %v1281 = vpack.c.b16 %v896, %v889
        %v1282 = vpack.c.b16 %v897, %v890
        %v1283 = vpack.c.b16 %v905, %v898
        %v1284 = vpack.c.b16 %v906, %v899
        %v1285 = vpack.c.b16 %v907, %v900
        %v1286 = vpack.c.b16 %v908, %v901
        %v1287 = vpack.c.b16 %v909, %v902
        %v1288 = vpack.c.b16 %v910, %v903
        %v1289 = vpack.c.b16 %v911, %v904
        %v1290 = vpack.c.b16 %v919, %v912
        %v1291 = vpack.c.b16 %v920, %v913
        %v1292 = vpack.c.b16 %v921, %v914
        %v1293 = vpack.c.b16 %v922, %v915
        %v1294 = vpack.c.b16 %v923, %v916
        %v1295 = vpack.c.b16 %v924, %v917
        %v1296 = vpack.c.b16 %v925, %v918
        %v1297 = vpack.c.b16 %v933, %v926
        %v1298 = vpack.c.b16 %v934, %v927
        %v1299 = vpack.c.b16 %v935, %v928
        %v1300 = vpack.c.b16 %v936, %v929
        %v1301 = vpack.c.b16 %v937, %v930
        %v1302 = vpack.c.b16 %v938, %v931
        %v1303 = vpack.c.b16 %v939, %v932
        %v1304 = vpack.c.b16 %v947, %v940
        %v1305 = vpack.c.b16 %v948, %v941
        %v1306 = vpack.c.b16 %v949, %v942
        %v1307 = vpack.c.b16 %v950, %v943
        %v1308 = vpack.c.b16 %v951, %v944
        %v1309 = vpack.c.b16 %v952, %v945
        %v1310 = vpack.c.b16 %v953, %v946
        %v1311 = vpack.c.b16 %v961, %v954
        %v1312 = vpack.c.b16 %v962, %v955
        %v1313 = vpack.c.b16 %v963, %v956
        %v1314 = vpack.c.b16 %v964, %v957
        %v1315 = vpack.c.b16 %v965, %v958
        %v1316 = vpack.c.b16 %v966, %v959
        %v1317 = vpack.c.b16 %v967, %v960
        %v1318 = vpack.c.b16 %v975, %v968
        %v1319 = vpack.c.b16 %v976, %v969
        %v1320 = vpack.c.b16 %v977, %v970
        %v1321 = vpack.c.b16 %v978, %v971
        %v1322 = vpack.c.b16 %v979, %v972
        %v1323 = vpack.c.b16 %v980, %v973
        %v1324 = vpack.c.b16 %v981, %v974
        %v1325 = vpack.c.b16 %v989, %v982
        %v1326 = vpack.c.b16 %v990, %v983
        %v1327 = vpack.c.b16 %v991, %v984
        %v1328 = vpack.c.b16 %v992, %v985
        %v1329 = vpack.c.b16 %v993, %v986
        %v1330 = vpack.c.b16 %v994, %v987
        %v1331 = vpack.c.b16 %v995, %v988
        %v1332 = vpack.c.b16 %v1003, %v996
        %v1333 = vpack.c.b16 %v1004, %v997
        %v1334 = vpack.c.b16 %v1005, %v998
        %v1335 = vpack.c.b16 %v1006, %v999
        %v1336 = vpack.c.b16 %v1007, %v1000
        %v1337 = vpack.c.b16 %v1008, %v1001
        %v1338 = vpack.c.b16 %v1009, %v1002
        %v1339 = vpack.c.b16 %v1017, %v1010
        %v1340 = vpack.c.b16 %v1018, %v1011
        %v1341 = vpack.c.b16 %v1019, %v1012
        %v1342 = vpack.c.b16 %v1020, %v1013
        %v1343 = vpack.c.b16 %v1021, %v1014
        %v1344 = vpack.c.b16 %v1022, %v1015
        %v1345 = vpack.c.b16 %v1023, %v1016
        %v1346 = vpack.c.b16 %v1031, %v1024
        %v1347 = vpack.c.b16 %v1032, %v1025
        %v1348 = vpack.c.b16 %v1033, %v1026
        %v1349 = vpack.c.b16 %v1034, %v1027
        %v1350 = vpack.c.b16 %v1035, %v1028
        %v1351 = vpack.c.b16 %v1036, %v1029
        %v1352 = vpack.c.b16 %v1037, %v1030
        %v1353 = vpack.c.b16 %v1045, %v1038
        %v1354 = vpack.c.b16 %v1046, %v1039
        %v1355 = vpack.c.b16 %v1047, %v1040
        %v1356 = vpack.c.b16 %v1048, %v1041
        %v1357 = vpack.c.b16 %v1049, %v1042
        %v1358 = vpack.c.b16 %v1050, %v1043
        %v1359 = vpack.c.b16 %v1051, %v1044
        %v1360 = vpack.c.b16 %v1059, %v1052
        %v1361 = vpack.c.b16 %v1060, %v1053
        %v1362 = vpack.c.b16 %v1061, %v1054
        %v1363 = vpack.c.b16 %v1062, %v1055
        %v1364 = vpack.c.b16 %v1063, %v1056
        %v1365 = vpack.c.b16 %v1064, %v1057
        %v1366 = vpack.c.b16 %v1065, %v1058
        %v1367 = vpack.c.b16 %v1073, %v1066
        %v1368 = vpack.c.b16 %v1074, %v1067
        %v1369 = vpack.c.b16 %v1075, %v1068
        %v1370 = vpack.c.b16 %v1076, %v1069
        %v1371 = vpack.c.b16 %v1077, %v1070
        %v1372 = vpack.c.b16 %v1078, %v1071
        %v1373 = vpack.c.b16 %v1079, %v1072
        %v1374 = vpack.c.b16 %v1087, %v1080
        %v1375 = vpack.c.b16 %v1088, %v1081
        %v1376 = vpack.c.b16 %v1089, %v1082
        %v1377 = vpack.c.b16 %v1090, %v1083
        %v1378 = vpack.c.b16 %v1091, %v1084
        %v1379 = vpack.c.b16 %v1092, %v1085
        %v1380 = vpack.c.b16 %v1093, %v1086
        %v1381 = vpack.c.b16 %v1101, %v1094
        %v1382 = vpack.c.b16 %v1102, %v1095
        %v1383 = vpack.c.b16 %v1103, %v1096
        %v1384 = vpack.c.b16 %v1104, %v1097
        %v1385 = vpack.c.b16 %v1105, %v1098
        %v1386 = vpack.c.b16 %v1106, %v1099
        %v1387 = vpack.c.b16 %v1107, %v1100
        %v1388 = vpack.c.b16 %v1115, %v1108
        %v1389 = vpack.c.b16 %v1116, %v1109
        %v1390 = vpack.c.b16 %v1117, %v1110
        %v1391 = vpack.c.b16 %v1118, %v1111
        %v1392 = vpack.c.b16 %v1119, %v1112
        %v1393 = vpack.c.b16 %v1120, %v1113
        %v1394 = vpack.c.b16 %v1121, %v1114
        %v1395 = vpack.c.b16 %v1129, %v1122
        %v1396 = vpack.c.b16 %v1130, %v1123
        %v1397 = vpack.c.b16 %v1131, %v1124
        %v1398 = vpack.c.b16 %v1132, %v1125
        %v1399 = vpack.c.b16 %v1133, %v1126
        %v1400 = vpack.c.b16 %v1134, %v1127
        %v1401 = vpack.c.b16 %v1135, %v1128
        %v1402 = vpack.c.b16 %v1143, %v1136
        %v1403 = vpack.c.b16 %v1144, %v1137
        %v1404 = vpack.c.b16 %v1145, %v1138
        %v1405 = vpack.c.b16 %v1146, %v1139
        %v1406 = vpack.c.b16 %v1147, %v1140
        %v1407 = vpack.c.b16 %v1148, %v1141
        %v1408 = vpack.c.b16 %v1149, %v1142
        %v1409 = vpack.c.b16 %v1157, %v1150
        %v1410 = vpack.c.b16 %v1158, %v1151
        %v1411 = vpack.c.b16 %v1159, %v1152
        %v1412 = vpack.c.b16 %v1160, %v1153
        %v1413 = vpack.c.b16 %v1161, %v1154
        %v1414 = vpack.c.b16 %v1162, %v1155
        %v1415 = vpack.c.b16 %v1163, %v1156
        %v1416 = vpack.c.b16 %v1171, %v1164
        %v1417 = vpack.c.b16 %v1172, %v1165
        %v1418 = vpack.c.b16 %v1173, %v1166
        %v1419 = vpack.c.b16 %v1174, %v1167
        %v1420 = vpack.c.b16 %v1175, %v1168
        %v1421 = vpack.c.b16 %v1176, %v1169
        %v1422 = vpack.c.b16 %v1177, %v1170
        %v1423 = vpack.c.b16 %v1185, %v1178
        %v1424 = vpack.c.b16 %v1186, %v1179
        %v1425 = vpack.c.b16 %v1187, %v1180
        %v1426 = vpack.c.b16 %v1188, %v1181
        %v1427 = vpack.c.b16 %v1189, %v1182
        %v1428 = vpack.c.b16 %v1190, %v1183
        %v1429 = vpack.c.b16 %v1191, %v1184
        %v1430 = vpack.c.b16 %v1199, %v1192
        %v1431 = vpack.c.b16 %v1200, %v1193
        %v1432 = vpack.c.b16 %v1201, %v1194
        %v1433 = vpack.c.b16 %v1202, %v1195
        %v1434 = vpack.c.b16 %v1203, %v1196
        %v1435 = vpack.c.b16 %v1204, %v1197
        %v1436 = vpack.c.b16 %v1205, %v1198
        %v1437 = vpack.c.b16 %v1213, %v1206
        %v1438 = vpack.c.b16 %v1214, %v1207
        %v1439 = vpack.c.b16 %v1215, %v1208
        %v1440 = vpack.c.b16 %v1216, %v1209
        %v1441 = vpack.c.b16 %v1217, %v1210
        %v1442 = vpack.c.b16 %v1218, %v1211
        %v1443 = vpack.c.b16 %v1219, %v1212
        %v1444 = vpack.c.b16 %v1227, %v1220
        %v1445 = vpack.c.b16 %v1228, %v1221
        %v1446 = vpack.c.b16 %v1229, %v1222
        %v1447 = vpack.c.b16 %v1230, %v1223
        %v1448 = vpack.c.b16 %v1231, %v1224
        %v1449 = vpack.c.b16 %v1232, %v1225
        %v1450 = vpack.c.b16 %v1233, %v1226
        %v1451 = vpack.c.b16 %v1241, %v1234
        %v1452 = vpack.c.b16 %v1242, %v1235
        %v1453 = vpack.c.b16 %v1243, %v1236
        %v1454 = vpack.c.b16 %v1244, %v1237
        %v1455 = vpack.c.b16 %v1245, %v1238
        %v1456 = vpack.c.b16 %v1246, %v1239
        %v1457 = vpack.c.b16 %v1247, %v1240
        %v1458 = vpack.c.b16 %v1255, %v1248
        %v1459 = vpack.c.b16 %v1256, %v1249
        %v1460 = vpack.c.b16 %v1257, %v1250
        %v1461 = vpack.c.b16 %v1258, %v1251
        %v1462 = vpack.c.b16 %v1259, %v1252
        %v1463 = vpack.c.b16 %v1260, %v1253
        %v1464 = vpack.c.b16 %v1261, %v1254
        %v1465 = vpack.c.b16 %v1269, %v1262
        %v1466 = vpack.c.b16 %v1270, %v1263
        %v1467 = vpack.c.b16 %v1271, %v1264
        %v1468 = vpack.c.b16 %v1272, %v1265
        %v1469 = vpack.c.b16 %v1273, %v1266
        %v1470 = vpack.c.b16 %v1274, %v1267
        %v1471 = vpack.c.b16 %v1275, %v1268
        %v1780 = vunpack.c.l.b16 %v324
        %v1781 = vunpack.c.h.b16 %v324
        %v1782 = vunpack.c.l.b16 %v325
        %v1783 = vunpack.c.h.b16 %v325
        %v1784 = vunpack.c.l.b16 %v326
        %v1785 = vunpack.c.h.b16 %v326
        %v1786 = vunpack.c.l.b16 %v327
        %v1787 = vunpack.c.h.b16 %v327
        %v1788 = vunpack.c.l.b16 %v328
        %v1789 = vunpack.c.h.b16 %v328
        %v1790 = vunpack.c.l.b16 %v329
        %v1791 = vunpack.c.h.b16 %v329
        %v1792 = vunpack.c.l.b16 %v330
        %v1793 = vunpack.c.h.b16 %v330
        %v1794 = vunpack.c.l.b16 %v331
        %v1795 = vunpack.c.h.b16 %v331
        %v1796 = vunpack.c.l.b16 %v332
        %v1797 = vunpack.c.h.b16 %v332
        %v1798 = vunpack.c.l.b16 %v333
        %v1799 = vunpack.c.h.b16 %v333
        %v1800 = vunpack.c.l.b16 %v334
        %v1801 = vunpack.c.h.b16 %v334
        %v1802 = vunpack.c.l.b16 %v335
        %v1803 = vunpack.c.h.b16 %v335
        %v1804 = vunpack.c.l.b16 %v336
        %v1805 = vunpack.c.h.b16 %v336
        %v1806 = vunpack.c.l.b16 %v337
        %v1807 = vunpack.c.h.b16 %v337
        %v1808 = vunpack.c.l.b16 %v338
        %v1809 = vunpack.c.h.b16 %v338
        %v1810 = vunpack.c.l.b16 %v339
        %v1811 = vunpack.c.h.b16 %v339
        %v1812 = vunpack.c.l.b16 %v340
        %v1813 = vunpack.c.h.b16 %v340
        %v1814 = vunpack.c.l.b16 %v341
        %v1815 = vunpack.c.h.b16 %v341
        %v1816 = vunpack.c.l.b16 %v342
        %v1817 = vunpack.c.h.b16 %v342
        %v1818 = vunpack.c.l.b16 %v343
        %v1819 = vunpack.c.h.b16 %v343
        %v1820 = vunpack.c.l.b16 %v344
        %v1821 = vunpack.c.h.b16 %v344
        %v1822 = vunpack.c.l.b16 %v345
        %v1823 = vunpack.c.h.b16 %v345
        %v1824 = vunpack.c.l.b16 %v346
        %v1825 = vunpack.c.h.b16 %v346
        %v1826 = vunpack.c.l.b16 %v347
        %v1827 = vunpack.c.h.b16 %v347
        %v1828 = vunpack.c.l.b16 %v348
        %v1829 = vunpack.c.h.b16 %v348
        %v1830 = vunpack.c.l.b16 %v349
        %v1831 = vunpack.c.h.b16 %v349
        %v1832 = vunpack.c.l.b16 %v350
        %v1833 = vunpack.c.h.b16 %v350
        %v1834 = vunpack.c.l.b16 %v351
        %v1835 = vunpack.c.h.b16 %v351
        %v1836 = vunpack.c.l.b16 %v352
        %v1837 = vunpack.c.h.b16 %v352
        %v1838 = vunpack.c.l.b16 %v353
        %v1839 = vunpack.c.h.b16 %v353
        %v1840 = vunpack.c.l.b16 %v354
        %v1841 = vunpack.c.h.b16 %v354
        %v1842 = vunpack.c.l.b16 %v355
        %v1843 = vunpack.c.h.b16 %v355
        %v1844 = vunpack.c.l.b16 %v356
        %v1845 = vunpack.c.h.b16 %v356
        %v1846 = vunpack.c.l.b16 %v357
        %v1847 = vunpack.c.h.b16 %v357
        %v1848 = vunpack.c.l.b16 %v358
        %v1849 = vunpack.c.h.b16 %v358
        %v1850 = vunpack.c.l.b16 %v359
        %v1851 = vunpack.c.h.b16 %v359
        %v1852 = vunpack.c.l.b16 %v360
        %v1853 = vunpack.c.h.b16 %v360
        %v1854 = vunpack.c.l.b16 %v361
        %v1855 = vunpack.c.h.b16 %v361
        %v1856 = vunpack.c.l.b16 %v362
        %v1857 = vunpack.c.h.b16 %v362
        %v1858 = vunpack.c.l.b16 %v363
        %v1859 = vunpack.c.h.b16 %v363
        %v1860 = vunpack.c.l.b16 %v364
        %v1861 = vunpack.c.h.b16 %v364
        %v1862 = vunpack.c.l.b16 %v365
        %v1863 = vunpack.c.h.b16 %v365
        %v1864 = vunpack.c.l.b16 %v366
        %v1865 = vunpack.c.h.b16 %v366
        %v1866 = vunpack.c.l.b16 %v367
        %v1867 = vunpack.c.h.b16 %v367
        %v1868 = vunpack.c.l.b16 %v368
        %v1869 = vunpack.c.h.b16 %v368
        %v1870 = vunpack.c.l.b16 %v369
        %v1871 = vunpack.c.h.b16 %v369
        %v1872 = vunpack.c.l.b16 %v370
        %v1873 = vunpack.c.h.b16 %v370
        %v1874 = vunpack.c.l.b16 %v371
        %v1875 = vunpack.c.h.b16 %v371
        %v1876 = vunpack.c.l.b16 %v372
        %v1877 = vunpack.c.h.b16 %v372
        %v1878 = vunpack.c.l.b16 %v373
        %v1879 = vunpack.c.h.b16 %v373
        %v1880 = vunpack.c.l.b16 %v374
        %v1881 = vunpack.c.h.b16 %v374
        %v1882 = vunpack.c.l.b16 %v375
        %v1883 = vunpack.c.h.b16 %v375
        %v1884 = vunpack.c.l.b16 %v376
        %v1885 = vunpack.c.h.b16 %v376
        %v1886 = vunpack.c.l.b16 %v377
        %v1887 = vunpack.c.h.b16 %v377
        %v1888 = vunpack.c.l.b16 %v378
        %v1889 = vunpack.c.h.b16 %v378
        %v1890 = vunpack.c.l.b16 %v379
        %v1891 = vunpack.c.h.b16 %v379
        %v1892 = vunpack.c.l.b16 %v380
        %v1893 = vunpack.c.h.b16 %v380
        %v1894 = vunpack.c.l.b16 %v381
        %v1895 = vunpack.c.h.b16 %v381
        %v1896 = vunpack.c.l.b16 %v382
        %v1897 = vunpack.c.h.b16 %v382
        %v1898 = vunpack.c.l.b16 %v383
        %v1899 = vunpack.c.h.b16 %v383
        %v1900 = vunpack.c.l.b16 %v384
        %v1901 = vunpack.c.h.b16 %v384
        %v1902 = vunpack.c.l.b16 %v385
        %v1903 = vunpack.c.h.b16 %v385
        %v1904 = vunpack.c.l.b16 %v386
        %v1905 = vunpack.c.h.b16 %v386
        %v1906 = vunpack.c.l.b16 %v387
        %v1907 = vunpack.c.h.b16 %v387
        %v1908 = vunpack.c.l.b16 %v388
        %v1909 = vunpack.c.h.b16 %v388
        %v1910 = vunpack.c.l.b16 %v389
        %v1911 = vunpack.c.h.b16 %v389
        %v1912 = vunpack.c.l.b16 %v390
        %v1913 = vunpack.c.h.b16 %v390
        %v1914 = vunpack.c.l.b16 %v391
        %v1915 = vunpack.c.h.b16 %v391
        %v1916 = vunpack.c.l.b16 %v392
        %v1917 = vunpack.c.h.b16 %v392
        %v1918 = vunpack.c.l.b16 %v393
        %v1919 = vunpack.c.h.b16 %v393
        %v1920 = vunpack.c.l.b16 %v394
        %v1921 = vunpack.c.h.b16 %v394
        %v1922 = vunpack.c.l.b16 %v395
        %v1923 = vunpack.c.h.b16 %v395
        %v1924 = vunpack.c.l.b16 %v396
        %v1925 = vunpack.c.h.b16 %v396
        %v1926 = vunpack.c.l.b16 %v397
        %v1927 = vunpack.c.h.b16 %v397
        %v1928 = vunpack.c.l.b16 %v398
        %v1929 = vunpack.c.h.b16 %v398
        %v1930 = vunpack.c.l.b16 %v399
        %v1931 = vunpack.c.h.b16 %v399
        %v1932 = vunpack.c.l.b16 %v400
        %v1933 = vunpack.c.h.b16 %v400
        %v1934 = vunpack.c.l.b16 %v401
        %v1935 = vunpack.c.h.b16 %v401
        %v1936 = vunpack.c.l.b16 %v402
        %v1937 = vunpack.c.h.b16 %v402
        %v1938 = vunpack.c.l.b16 %v403
        %v1939 = vunpack.c.h.b16 %v403
        %v1940 = vunpack.c.l.b16 %v404
        %v1941 = vunpack.c.h.b16 %v404
        %v1942 = vunpack.c.l.b16 %v405
        %v1943 = vunpack.c.h.b16 %v405
        %v1944 = vunpack.c.l.b16 %v406
        %v1945 = vunpack.c.h.b16 %v406
        %v1946 = vunpack.c.l.b16 %v407
        %v1947 = vunpack.c.h.b16 %v407
        %v1948 = vunpack.c.l.b16 %v408
        %v1949 = vunpack.c.h.b16 %v408
        %v1950 = vunpack.c.l.b16 %v409
        %v1951 = vunpack.c.h.b16 %v409
        %v1952 = vunpack.c.l.b16 %v410
        %v1953 = vunpack.c.h.b16 %v410
        %v1954 = vunpack.c.l.b16 %v411
        %v1955 = vunpack.c.h.b16 %v411
        %v1956 = vunpack.c.l.b16 %v412
        %v1957 = vunpack.c.h.b16 %v412
        %v1958 = vunpack.c.l.b16 %v413
        %v1959 = vunpack.c.h.b16 %v413
        %v1960 = vunpack.c.l.b16 %v414
        %v1961 = vunpack.c.h.b16 %v414
        %v1962 = vunpack.c.l.b16 %v415
        %v1963 = vunpack.c.h.b16 %v415
        %v1964 = vunpack.c.l.b16 %v416
        %v1965 = vunpack.c.h.b16 %v416
        %v1966 = vunpack.c.l.b16 %v417
        %v1967 = vunpack.c.h.b16 %v417
        %v1968 = vunpack.c.l.b16 %v418
        %v1969 = vunpack.c.h.b16 %v418
        %v1970 = vunpack.c.l.b16 %v419
        %v1971 = vunpack.c.h.b16 %v419
        %v1972 = vunpack.c.l.b16 %v420
        %v1973 = vunpack.c.h.b16 %v420
        %v1974 = vunpack.c.l.b16 %v421
        %v1975 = vunpack.c.h.b16 %v421
        %v1976 = vunpack.c.l.b16 %v422
        %v1977 = vunpack.c.h.b16 %v422
        %v1978 = vunpack.c.l.b16 %v423
        %v1979 = vunpack.c.h.b16 %v423
        %v1980 = vunpack.c.l.b16 %v424
        %v1981 = vunpack.c.h.b16 %v424
        %v1982 = vunpack.c.l.b16 %v425
        %v1983 = vunpack.c.h.b16 %v425
        %v1984 = vunpack.c.l.b16 %v426
        %v1985 = vunpack.c.h.b16 %v426
        %v1986 = vunpack.c.l.b16 %v427
        %v1987 = vunpack.c.h.b16 %v427
        %v1988 = vunpack.c.l.b16 %v428
        %v1989 = vunpack.c.h.b16 %v428
        %v1990 = vunpack.c.l.b16 %v429
        %v1991 = vunpack.c.h.b16 %v429
        %v1992 = vunpack.c.l.b16 %v430
        %v1993 = vunpack.c.h.b16 %v430
        %v1994 = vunpack.c.l.b16 %v431
        %v1995 = vunpack.c.h.b16 %v431
        %v1996 = vunpack.c.l.b16 %v432
        %v1997 = vunpack.c.h.b16 %v432
        %v1998 = vunpack.c.l.b16 %v433
        %v1999 = vunpack.c.h.b16 %v433
        %v2000 = vunpack.c.l.b16 %v434
        %v2001 = vunpack.c.h.b16 %v434
        %v2002 = vunpack.c.l.b16 %v435
        %v2003 = vunpack.c.h.b16 %v435
        %v2004 = vpack.c.b16 %v1782, %v1780
        %v2005 = vpack.c.b16 %v1783, %v1781
        %v2006 = vpack.c.b16 %v1786, %v1784
        %v2007 = vpack.c.b16 %v1787, %v1785
        %v2008 = vpack.c.b16 %v1790, %v1788
        %v2009 = vpack.c.b16 %v1791, %v1789
        %v2010 = vpack.c.b16 %v1794, %v1792
        %v2011 = vpack.c.b16 %v1795, %v1793
        %v2012 = vpack.c.b16 %v1798, %v1796
        %v2013 = vpack.c.b16 %v1799, %v1797
        %v2014 = vpack.c.b16 %v1802, %v1800
        %v2015 = vpack.c.b16 %v1803, %v1801
        %v2016 = vpack.c.b16 %v1806, %v1804
        %v2017 = vpack.c.b16 %v1807, %v1805
        %v2018 = vpack.c.b16 %v1810, %v1808
        %v2019 = vpack.c.b16 %v1811, %v1809
        %v2020 = vpack.c.b16 %v1814, %v1812
        %v2021 = vpack.c.b16 %v1815, %v1813
        %v2022 = vpack.c.b16 %v1818, %v1816
        %v2023 = vpack.c.b16 %v1819, %v1817
        %v2024 = vpack.c.b16 %v1822, %v1820
        %v2025 = vpack.c.b16 %v1823, %v1821
        %v2026 = vpack.c.b16 %v1826, %v1824
        %v2027 = vpack.c.b16 %v1827, %v1825
        %v2028 = vpack.c.b16 %v1830, %v1828
        %v2029 = vpack.c.b16 %v1831, %v1829
        %v2030 = vpack.c.b16 %v1834, %v1832
        %v2031 = vpack.c.b16 %v1835, %v1833
        %v2032 = vpack.c.b16 %v1838, %v1836
        %v2033 = vpack.c.b16 %v1839, %v1837
        %v2034 = vpack.c.b16 %v1842, %v1840
        %v2035 = vpack.c.b16 %v1843, %v1841
        %v2036 = vpack.c.b16 %v1846, %v1844
        %v2037 = vpack.c.b16 %v1847, %v1845
        %v2038 = vpack.c.b16 %v1850, %v1848
        %v2039 = vpack.c.b16 %v1851, %v1849
        %v2040 = vpack.c.b16 %v1854, %v1852
        %v2041 = vpack.c.b16 %v1855, %v1853
        %v2042 = vpack.c.b16 %v1858, %v1856
        %v2043 = vpack.c.b16 %v1859, %v1857
        %v2044 = vpack.c.b16 %v1862, %v1860
        %v2045 = vpack.c.b16 %v1863, %v1861
        %v2046 = vpack.c.b16 %v1866, %v1864
        %v2047 = vpack.c.b16 %v1867, %v1865
        %v2048 = vpack.c.b16 %v1870, %v1868
        %v2049 = vpack.c.b16 %v1871, %v1869
        %v2050 = vpack.c.b16 %v1874, %v1872
        %v2051 = vpack.c.b16 %v1875, %v1873
        %v2052 = vpack.c.b16 %v1878, %v1876
        %v2053 = vpack.c.b16 %v1879, %v1877
        %v2054 = vpack.c.b16 %v1882, %v1880
        %v2055 = vpack.c.b16 %v1883, %v1881
        %v2056 = vpack.c.b16 %v1886, %v1884
        %v2057 = vpack.c.b16 %v1887, %v1885
        %v2058 = vpack.c.b16 %v1890, %v1888
        %v2059 = vpack.c.b16 %v1891, %v1889
        %v2060 = vpack.c.b16 %v1894, %v1892
        %v2061 = vpack.c.b16 %v1895, %v1893
        %v2062 = vpack.c.b16 %v1898, %v1896
        %v2063 = vpack.c.b16 %v1899, %v1897
        %v2064 = vpack.c.b16 %v1902, %v1900
        %v2065 = vpack.c.b16 %v1903, %v1901
        %v2066 = vpack.c.b16 %v1906, %v1904
        %v2067 = vpack.c.b16 %v1907, %v1905
        %v2068 = vpack.c.b16 %v1910, %v1908
        %v2069 = vpack.c.b16 %v1911, %v1909
        %v2070 = vpack.c.b16 %v1914, %v1912
        %v2071 = vpack.c.b16 %v1915, %v1913
        %v2072 = vpack.c.b16 %v1918, %v1916
        %v2073 = vpack.c.b16 %v1919, %v1917
        %v2074 = vpack.c.b16 %v1922, %v1920
        %v2075 = vpack.c.b16 %v1923, %v1921
        %v2076 = vpack.c.b16 %v1926, %v1924
        %v2077 = vpack.c.b16 %v1927, %v1925
        %v2078 = vpack.c.b16 %v1930, %v1928
        %v2079 = vpack.c.b16 %v1931, %v1929
        %v2080 = vpack.c.b16 %v1934, %v1932
        %v2081 = vpack.c.b16 %v1935, %v1933
        %v2082 = vpack.c.b16 %v1938, %v1936
        %v2083 = vpack.c.b16 %v1939, %v1937
        %v2084 = vpack.c.b16 %v1942, %v1940
        %v2085 = vpack.c.b16 %v1943, %v1941
        %v2086 = vpack.c.b16 %v1946, %v1944
        %v2087 = vpack.c.b16 %v1947, %v1945
        %v2088 = vpack.c.b16 %v1950, %v1948
        %v2089 = vpack.c.b16 %v1951, %v1949
        %v2090 = vpack.c.b16 %v1954, %v1952
        %v2091 = vpack.c.b16 %v1955, %v1953
        %v2092 = vpack.c.b16 %v1958, %v1956
        %v2093 = vpack.c.b16 %v1959, %v1957
        %v2094 = vpack.c.b16 %v1962, %v1960
        %v2095 = vpack.c.b16 %v1963, %v1961
        %v2096 = vpack.c.b16 %v1966, %v1964
        %v2097 = vpack.c.b16 %v1967, %v1965
        %v2098 = vpack.c.b16 %v1970, %v1968
        %v2099 = vpack.c.b16 %v1971, %v1969
        %v2100 = vpack.c.b16 %v1974, %v1972
        %v2101 = vpack.c.b16 %v1975, %v1973
        %v2102 = vpack.c.b16 %v1978, %v1976
        %v2103 = vpack.c.b16 %v1979, %v1977
        %v2104 = vpack.c.b16 %v1982, %v1980
        %v2105 = vpack.c.b16 %v1983, %v1981
        %v2106 = vpack.c.b16 %v1986, %v1984
        %v2107 = vpack.c.b16 %v1987, %v1985
        %v2108 = vpack.c.b16 %v1990, %v1988
        %v2109 = vpack.c.b16 %v1991, %v1989
        %v2110 = vpack.c.b16 %v1994, %v1992
        %v2111 = vpack.c.b16 %v1995, %v1993
        %v2112 = vpack.c.b16 %v1998, %v1996
        %v2113 = vpack.c.b16 %v1999, %v1997
        %v2114 = vpack.c.b16 %v2002, %v2000
        %v2115 = vpack.c.b16 %v2003, %v2001
        %2228 = vmatprep.subr.bf16.mxu0 %v2005
        %2229 = vmatpush1.bf16.msra.mxu0 %v2004
        %2230 = vmatprep.subr.bf16.mxu0 %v2007
        %2231 = vmatpush1.bf16.msra.mxu0 %v2006
        %2232 = vmatprep.subr.bf16.mxu0 %v2009
        %2233 = vmatpush1.bf16.msra.mxu0 %v2008
        %2234 = vmatprep.subr.bf16.mxu0 %v2011
        %2235 = vmatpush1.bf16.msra.mxu0 %v2010
        %2236 = vmatprep.subr.bf16.mxu0 %v2013
        %2237 = vmatpush1.bf16.msra.mxu0 %v2012
        %2238 = vmatprep.subr.bf16.mxu0 %v2015
        %2239 = vmatpush1.bf16.msra.mxu0 %v2014
        %2240 = vmatprep.subr.bf16.mxu0 %v2017
        %2241 = vmatpush1.bf16.msra.mxu0 %v2016
        %2242 = vmatprep.subr.bf16.mxu0 %v2019
        %2243 = vmatpush1.bf16.msra.mxu0 %v2018
        %2244 = vmatprep.subr.bf16.mxu0 %v2021
        %2245 = vmatpush1.bf16.msra.mxu0 %v2020
        %2246 = vmatprep.subr.bf16.mxu0 %v2023
        %2247 = vmatpush1.bf16.msra.mxu0 %v2022
        %2248 = vmatprep.subr.bf16.mxu0 %v2025
        %2249 = vmatpush1.bf16.msra.mxu0 %v2024
        %2250 = vmatprep.subr.bf16.mxu0 %v2027
        %2251 = vmatpush1.bf16.msra.mxu0 %v2026
        %2252 = vmatprep.subr.bf16.mxu0 %v2029
        %2253 = vmatpush1.bf16.msra.mxu0 %v2028
        %2254 = vmatprep.subr.bf16.mxu0 %v2031
        %2255 = vmatpush1.bf16.msra.mxu0 %v2030
        %2256 = vmatprep.subr.bf16.mxu0 %v2033
        %2257 = vmatpush1.bf16.msra.mxu0 %v2032
        %2258 = vmatprep.subr.bf16.mxu0 %v2035
        %2259 = vmatpush1.bf16.msra.mxu0 %v2034
        %2260 = vmatprep.mubr.bf16.mxu0 %v1277
        %2261 = vmatmul.mubr.bf16.gmra.mrb[0].mxu0 %v1276
        %v2262 = vpop.f32.mrb[0].mxu0
        %v2263 = vadd.f32 0.0, %v2262
        %v2264 = vpop.f32.mrb[0].mxu0
        %v2265 = vadd.f32 0.0, %v2264
        %v2266 = vpop.f32.mrb[0].mxu0
        %v2267 = vadd.f32 0.0, %v2266
        %v2268 = vpop.f32.mrb[0].mxu0
        %v2269 = vadd.f32 0.0, %v2268
        %2270 = vmatprep.mubr.bf16.mxu0 %v1284
        %2271 = vmatmul.mubr.bf16.gmra.mrb[0].mxu0 %v1283
        %v2272 = vpop.f32.mrb[0].mxu0
        %v2273 = vadd.f32 0.0, %v2272
        %v2274 = vpop.f32.mrb[0].mxu0
        %v2275 = vadd.f32 0.0, %v2274
        %v2276 = vpop.f32.mrb[0].mxu0
        %v2277 = vadd.f32 0.0, %v2276
        %v2278 = vpop.f32.mrb[0].mxu0
        %v2279 = vadd.f32 0.0, %v2278
        %2280 = vmatprep.mubr.bf16.mxu0 %v1291
        %2281 = vmatmul.mubr.bf16.gmra.mrb[0].mxu0 %v1290
        %v2282 = vpop.f32.mrb[0].mxu0
        %v2283 = vadd.f32 0.0, %v2282
        %v2284 = vpop.f32.mrb[0].mxu0
        %v2285 = vadd.f32 0.0, %v2284
        %v2286 = vpop.f32.mrb[0].mxu0
        %v2287 = vadd.f32 0.0, %v2286
        %v2288 = vpop.f32.mrb[0].mxu0
        %v2289 = vadd.f32 0.0, %v2288
        %2290 = vmatprep.mubr.bf16.mxu0 %v1298
        %2291 = vmatmul.mubr.bf16.gmra.mrb[0].mxu0 %v1297
        %v2292 = vpop.f32.mrb[0].mxu0
        %v2293 = vadd.f32 0.0, %v2292
        %v2294 = vpop.f32.mrb[0].mxu0
        %v2295 = vadd.f32 0.0, %v2294
        %v2296 = vpop.f32.mrb[0].mxu0
        %v2297 = vadd.f32 0.0, %v2296
        %v2298 = vpop.f32.mrb[0].mxu0
        %v2299 = vadd.f32 0.0, %v2298
        %2300 = vmatprep.mubr.bf16.mxu0 %v1305
        %2301 = vmatmul.mubr.bf16.gmra.mrb[0].mxu0 %v1304
        %v2302 = vpop.f32.mrb[0].mxu0
        %v2303 = vadd.f32 0.0, %v2302
        %v2304 = vpop.f32.mrb[0].mxu0
        %v2305 = vadd.f32 0.0, %v2304
        %v2306 = vpop.f32.mrb[0].mxu0
        %v2307 = vadd.f32 0.0, %v2306
        %v2308 = vpop.f32.mrb[0].mxu0
        %v2309 = vadd.f32 0.0, %v2308
        %2310 = vmatprep.mubr.bf16.mxu0 %v1312
        %2311 = vmatmul.mubr.bf16.gmra.mrb[0].mxu0 %v1311
        %v2312 = vpop.f32.mrb[0].mxu0
        %v2313 = vadd.f32 0.0, %v2312
        %v2314 = vpop.f32.mrb[0].mxu0
        %v2315 = vadd.f32 0.0, %v2314
        %v2316 = vpop.f32.mrb[0].mxu0
        %v2317 = vadd.f32 0.0, %v2316
        %v2318 = vpop.f32.mrb[0].mxu0
        %v2319 = vadd.f32 0.0, %v2318
        %2320 = vmatprep.mubr.bf16.mxu0 %v1319
        %2321 = vmatmul.mubr.bf16.gmra.mrb[0].mxu0 %v1318
        %v2322 = vpop.f32.mrb[0].mxu0
        %v2323 = vadd.f32 0.0, %v2322
        %v2324 = vpop.f32.mrb[0].mxu0
        %v2325 = vadd.f32 0.0, %v2324
        %v2326 = vpop.f32.mrb[0].mxu0
        %v2327 = vadd.f32 0.0, %v2326
        %v2328 = vpop.f32.mrb[0].mxu0
        %v2329 = vadd.f32 0.0, %v2328
        %2330 = vmatprep.mubr.bf16.mxu0 %v1326
        %2331 = vmatmul.mubr.bf16.gmra.mrb[0].mxu0 %v1325
        %v2332 = vpop.f32.mrb[0].mxu0
        %v2333 = vadd.f32 0.0, %v2332
        %v2334 = vpop.f32.mrb[0].mxu0
        %v2335 = vadd.f32 0.0, %v2334
        %v2336 = vpop.f32.mrb[0].mxu0
        %v2337 = vadd.f32 0.0, %v2336
        %v2338 = vpop.f32.mrb[0].mxu0
        %v2339 = vadd.f32 0.0, %v2338
        %2340 = vmatprep.mubr.bf16.mxu0 %v1333
        %2341 = vmatmul.mubr.bf16.gmra.mrb[0].mxu0 %v1332
        %v2342 = vpop.f32.mrb[0].mxu0
        %v2343 = vadd.f32 0.0, %v2342
        %v2344 = vpop.f32.mrb[0].mxu0
        %v2345 = vadd.f32 0.0, %v2344
        %v2346 = vpop.f32.mrb[0].mxu0
        %v2347 = vadd.f32 0.0, %v2346
        %v2348 = vpop.f32.mrb[0].mxu0
        %v2349 = vadd.f32 0.0, %v2348
        %2350 = vmatprep.mubr.bf16.mxu0 %v1340
        %2351 = vmatmul.mubr.bf16.gmra.mrb[0].mxu0 %v1339
        %v2352 = vpop.f32.mrb[0].mxu0
        %v2353 = vadd.f32 0.0, %v2352
        %v2354 = vpop.f32.mrb[0].mxu0
        %v2355 = vadd.f32 0.0, %v2354
        %v2356 = vpop.f32.mrb[0].mxu0
        %v2357 = vadd.f32 0.0, %v2356
        %v2358 = vpop.f32.mrb[0].mxu0
        %v2359 = vadd.f32 0.0, %v2358
        %2360 = vmatprep.mubr.bf16.mxu0 %v1347
        %2361 = vmatmul.mubr.bf16.gmra.mrb[0].mxu0 %v1346
        %v2362 = vpop.f32.mrb[0].mxu0
        %v2363 = vadd.f32 0.0, %v2362
        %v2364 = vpop.f32.mrb[0].mxu0
        %v2365 = vadd.f32 0.0, %v2364
        %v2366 = vpop.f32.mrb[0].mxu0
        %v2367 = vadd.f32 0.0, %v2366
        %v2368 = vpop.f32.mrb[0].mxu0
        %v2369 = vadd.f32 0.0, %v2368
        %2370 = vmatprep.mubr.bf16.mxu0 %v1354
        %2371 = vmatmul.mubr.bf16.gmra.mrb[0].mxu0 %v1353
        %v2372 = vpop.f32.mrb[0].mxu0
        %v2373 = vadd.f32 0.0, %v2372
        %v2374 = vpop.f32.mrb[0].mxu0
        %v2375 = vadd.f32 0.0, %v2374
        %v2376 = vpop.f32.mrb[0].mxu0
        %v2377 = vadd.f32 0.0, %v2376
        %v2378 = vpop.f32.mrb[0].mxu0
        %v2379 = vadd.f32 0.0, %v2378
        %2380 = vmatprep.mubr.bf16.mxu0 %v1361
        %2381 = vmatmul.mubr.bf16.gmra.mrb[0].mxu0 %v1360
        %v2382 = vpop.f32.mrb[0].mxu0
        %v2383 = vadd.f32 0.0, %v2382
        %v2384 = vpop.f32.mrb[0].mxu0
        %v2385 = vadd.f32 0.0, %v2384
        %v2386 = vpop.f32.mrb[0].mxu0
        %v2387 = vadd.f32 0.0, %v2386
        %v2388 = vpop.f32.mrb[0].mxu0
        %v2389 = vadd.f32 0.0, %v2388
        %2390 = vmatprep.mubr.bf16.mxu0 %v1368
        %2391 = vmatmul.mubr.bf16.gmra.mrb[0].mxu0 %v1367
        %v2392 = vpop.f32.mrb[0].mxu0
        %v2393 = vadd.f32 0.0, %v2392
        %v2394 = vpop.f32.mrb[0].mxu0
        %v2395 = vadd.f32 0.0, %v2394
        %v2396 = vpop.f32.mrb[0].mxu0
        %v2397 = vadd.f32 0.0, %v2396
        %v2398 = vpop.f32.mrb[0].mxu0
        %v2399 = vadd.f32 0.0, %v2398
        %2400 = vmatprep.mubr.bf16.mxu0 %v1375
        %2401 = vmatmul.mubr.bf16.gmra.mrb[0].mxu0 %v1374
        %v2402 = vpop.f32.mrb[0].mxu0
        %v2403 = vadd.f32 0.0, %v2402
        %v2404 = vpop.f32.mrb[0].mxu0
        %v2405 = vadd.f32 0.0, %v2404
        %v2406 = vpop.f32.mrb[0].mxu0
        %v2407 = vadd.f32 0.0, %v2406
        %v2408 = vpop.f32.mrb[0].mxu0
        %v2409 = vadd.f32 0.0, %v2408
        %2410 = vmatprep.mubr.bf16.mxu0 %v1382
        %2411 = vmatmul.mubr.bf16.gmra.mrb[0].mxu0 %v1381
        %v2412 = vpop.f32.mrb[0].mxu0
        %v2413 = vadd.f32 0.0, %v2412
        %v2414 = vpop.f32.mrb[0].mxu0
        %v2415 = vadd.f32 0.0, %v2414
        %v2416 = vpop.f32.mrb[0].mxu0
        %v2417 = vadd.f32 0.0, %v2416
        %v2418 = vpop.f32.mrb[0].mxu0
        %v2419 = vadd.f32 0.0, %v2418
        %2420 = vmatprep.mubr.bf16.mxu0 %v1389
        %2421 = vmatmul.mubr.bf16.gmra.mrb[0].mxu0 %v1388
        %v2422 = vpop.f32.mrb[0].mxu0
        %v2423 = vadd.f32 0.0, %v2422
        %v2424 = vpop.f32.mrb[0].mxu0
        %v2425 = vadd.f32 0.0, %v2424
        %v2426 = vpop.f32.mrb[0].mxu0
        %v2427 = vadd.f32 0.0, %v2426
        %v2428 = vpop.f32.mrb[0].mxu0
        %v2429 = vadd.f32 0.0, %v2428
        %2430 = vmatprep.mubr.bf16.mxu0 %v1396
        %2431 = vmatmul.mubr.bf16.gmra.mrb[0].mxu0 %v1395
        %v2432 = vpop.f32.mrb[0].mxu0
        %v2433 = vadd.f32 0.0, %v2432
        %v2434 = vpop.f32.mrb[0].mxu0
        %v2435 = vadd.f32 0.0, %v2434
        %v2436 = vpop.f32.mrb[0].mxu0
        %v2437 = vadd.f32 0.0, %v2436
        %v2438 = vpop.f32.mrb[0].mxu0
        %v2439 = vadd.f32 0.0, %v2438
        %2440 = vmatprep.mubr.bf16.mxu0 %v1403
        %2441 = vmatmul.mubr.bf16.gmra.mrb[0].mxu0 %v1402
        %v2442 = vpop.f32.mrb[0].mxu0
        %v2443 = vadd.f32 0.0, %v2442
        %v2444 = vpop.f32.mrb[0].mxu0
        %v2445 = vadd.f32 0.0, %v2444
        %v2446 = vpop.f32.mrb[0].mxu0
        %v2447 = vadd.f32 0.0, %v2446
        %v2448 = vpop.f32.mrb[0].mxu0
        %v2449 = vadd.f32 0.0, %v2448
        %2450 = vmatprep.mubr.bf16.mxu0 %v1410
        %2451 = vmatmul.mubr.bf16.gmra.mrb[0].mxu0 %v1409
        %v2452 = vpop.f32.mrb[0].mxu0
        %v2453 = vadd.f32 0.0, %v2452
        %v2454 = vpop.f32.mrb[0].mxu0
        %v2455 = vadd.f32 0.0, %v2454
        %v2456 = vpop.f32.mrb[0].mxu0
        %v2457 = vadd.f32 0.0, %v2456
        %v2458 = vpop.f32.mrb[0].mxu0
        %v2459 = vadd.f32 0.0, %v2458
        %2460 = vmatprep.mubr.bf16.mxu0 %v1417
        %2461 = vmatmul.mubr.bf16.gmra.mrb[0].mxu0 %v1416
        %v2462 = vpop.f32.mrb[0].mxu0
        %v2463 = vadd.f32 0.0, %v2462
        %v2464 = vpop.f32.mrb[0].mxu0
        %v2465 = vadd.f32 0.0, %v2464
        %v2466 = vpop.f32.mrb[0].mxu0
        %v2467 = vadd.f32 0.0, %v2466
        %v2468 = vpop.f32.mrb[0].mxu0
        %v2469 = vadd.f32 0.0, %v2468
        %2470 = vmatprep.mubr.bf16.mxu0 %v1424
        %2471 = vmatmul.mubr.bf16.gmra.mrb[0].mxu0 %v1423
        %v2472 = vpop.f32.mrb[0].mxu0
        %v2473 = vadd.f32 0.0, %v2472
        %v2474 = vpop.f32.mrb[0].mxu0
        %v2475 = vadd.f32 0.0, %v2474
        %v2476 = vpop.f32.mrb[0].mxu0
        %v2477 = vadd.f32 0.0, %v2476
        %v2478 = vpop.f32.mrb[0].mxu0
        %v2479 = vadd.f32 0.0, %v2478
        %2480 = vmatprep.mubr.bf16.mxu0 %v1431
        %2481 = vmatmul.mubr.bf16.gmra.mrb[0].mxu0 %v1430
        %v2482 = vpop.f32.mrb[0].mxu0
        %v2483 = vadd.f32 0.0, %v2482
        %v2484 = vpop.f32.mrb[0].mxu0
        %v2485 = vadd.f32 0.0, %v2484
        %v2486 = vpop.f32.mrb[0].mxu0
        %v2487 = vadd.f32 0.0, %v2486
        %v2488 = vpop.f32.mrb[0].mxu0
        %v2489 = vadd.f32 0.0, %v2488
        %2490 = vmatprep.mubr.bf16.mxu0 %v1438
        %2491 = vmatmul.mubr.bf16.gmra.mrb[0].mxu0 %v1437
        %v2492 = vpop.f32.mrb[0].mxu0
        %v2493 = vadd.f32 0.0, %v2492
        %v2494 = vpop.f32.mrb[0].mxu0
        %v2495 = vadd.f32 0.0, %v2494
        %v2496 = vpop.f32.mrb[0].mxu0
        %v2497 = vadd.f32 0.0, %v2496
        %v2498 = vpop.f32.mrb[0].mxu0
        %v2499 = vadd.f32 0.0, %v2498
        %2500 = vmatprep.mubr.bf16.mxu0 %v1445
        %2501 = vmatmul.mubr.bf16.gmra.mrb[0].mxu0 %v1444
        %v2502 = vpop.f32.mrb[0].mxu0
        %v2503 = vadd.f32 0.0, %v2502
        %v2504 = vpop.f32.mrb[0].mxu0
        %v2505 = vadd.f32 0.0, %v2504
        %v2506 = vpop.f32.mrb[0].mxu0
        %v2507 = vadd.f32 0.0, %v2506
        %v2508 = vpop.f32.mrb[0].mxu0
        %v2509 = vadd.f32 0.0, %v2508
        %2510 = vmatprep.mubr.bf16.mxu0 %v1452
        %2511 = vmatmul.mubr.bf16.gmra.mrb[0].mxu0 %v1451
        %v2512 = vpop.f32.mrb[0].mxu0
        %v2513 = vadd.f32 0.0, %v2512
        %v2514 = vpop.f32.mrb[0].mxu0
        %v2515 = vadd.f32 0.0, %v2514
        %v2516 = vpop.f32.mrb[0].mxu0
        %v2517 = vadd.f32 0.0, %v2516
        %v2518 = vpop.f32.mrb[0].mxu0
        %v2519 = vadd.f32 0.0, %v2518
        %2520 = vmatprep.mubr.bf16.mxu0 %v1459
        %2521 = vmatmul.mubr.bf16.gmra.mrb[0].mxu0 %v1458
        %v2522 = vpop.f32.mrb[0].mxu0
        %v2523 = vadd.f32 0.0, %v2522
        %v2524 = vpop.f32.mrb[0].mxu0
        %v2525 = vadd.f32 0.0, %v2524
        %v2526 = vpop.f32.mrb[0].mxu0
        %v2527 = vadd.f32 0.0, %v2526
        %v2528 = vpop.f32.mrb[0].mxu0
        %v2529 = vadd.f32 0.0, %v2528
        %2530 = vmatprep.mubr.bf16.mxu0 %v1466
        %2531 = vmatmul.mubr.bf16.gmra.mrb[0].mxu0 %v1465
        %v2532 = vpop.f32.mrb[0].mxu0
        %v2533 = vadd.f32 0.0, %v2532
        %v2534 = vpop.f32.mrb[0].mxu0
        %v2535 = vadd.f32 0.0, %v2534
        %v2536 = vpop.f32.mrb[0].mxu0
        %v2537 = vadd.f32 0.0, %v2536
        %v2538 = vpop.f32.mrb[0].mxu0
        %v2539 = vadd.f32 0.0, %v2538
        %2540 = vdwg.mxu0
        %2541 = vmatprep.subr.bf16.mxu0 %v2037
        %2542 = vmatpush1.bf16.msra.mxu0 %v2036
        %2543 = vmatprep.subr.bf16.mxu0 %v2039
        %2544 = vmatpush1.bf16.msra.mxu0 %v2038
        %2545 = vmatprep.subr.bf16.mxu0 %v2041
        %2546 = vmatpush1.bf16.msra.mxu0 %v2040
        %2547 = vmatprep.subr.bf16.mxu0 %v2043
        %2548 = vmatpush1.bf16.msra.mxu0 %v2042
        %2549 = vmatprep.subr.bf16.mxu0 %v2045
        %2550 = vmatpush1.bf16.msra.mxu0 %v2044
        %2551 = vmatprep.subr.bf16.mxu0 %v2047
        %2552 = vmatpush1.bf16.msra.mxu0 %v2046
        %2553 = vmatprep.subr.bf16.mxu0 %v2049
        %2554 = vmatpush1.bf16.msra.mxu0 %v2048
        %2555 = vmatprep.subr.bf16.mxu0 %v2051
        %2556 = vmatpush1.bf16.msra.mxu0 %v2050
        %2557 = vmatprep.subr.bf16.mxu0 %v2053
        %2558 = vmatpush1.bf16.msra.mxu0 %v2052
        %2559 = vmatprep.subr.bf16.mxu0 %v2055
        %2560 = vmatpush1.bf16.msra.mxu0 %v2054
        %2561 = vmatprep.subr.bf16.mxu0 %v2057
        %2562 = vmatpush1.bf16.msra.mxu0 %v2056
        %2563 = vmatprep.subr.bf16.mxu0 %v2059
        %2564 = vmatpush1.bf16.msra.mxu0 %v2058
        %2565 = vmatprep.subr.bf16.mxu0 %v2061
        %2566 = vmatpush1.bf16.msra.mxu0 %v2060
        %2567 = vmatprep.subr.bf16.mxu0 %v2063
        %2568 = vmatpush1.bf16.msra.mxu0 %v2062
        %2569 = vmatprep.subr.bf16.mxu0 %v2065
        %2570 = vmatpush1.bf16.msra.mxu0 %v2064
        %2571 = vmatprep.subr.bf16.mxu0 %v2067
        %2572 = vmatpush1.bf16.msra.mxu0 %v2066
        %2573 = vmatprep.mubr.bf16.mxu0 %v1279
        %2574 = vmatmul.mubr.bf16.gmra.mrb[0].mxu0 %v1278
        %v2575 = vpop.f32.mrb[0].mxu0
        %v2576 = vadd.f32 %v2263, %v2575
        %v2577 = vpop.f32.mrb[0].mxu0
        %v2578 = vadd.f32 %v2265, %v2577
        %v2579 = vpop.f32.mrb[0].mxu0
        %v2580 = vadd.f32 %v2267, %v2579
        %v2581 = vpop.f32.mrb[0].mxu0
        %v2582 = vadd.f32 %v2269, %v2581
        %2583 = vmatprep.mubr.bf16.mxu0 %v1286
        %2584 = vmatmul.mubr.bf16.gmra.mrb[0].mxu0 %v1285
        %v2585 = vpop.f32.mrb[0].mxu0
        %v2586 = vadd.f32 %v2273, %v2585
        %v2587 = vpop.f32.mrb[0].mxu0
        %v2588 = vadd.f32 %v2275, %v2587
        %v2589 = vpop.f32.mrb[0].mxu0
        %v2590 = vadd.f32 %v2277, %v2589
        %v2591 = vpop.f32.mrb[0].mxu0
        %v2592 = vadd.f32 %v2279, %v2591
        %2593 = vmatprep.mubr.bf16.mxu0 %v1293
        %2594 = vmatmul.mubr.bf16.gmra.mrb[0].mxu0 %v1292
        %v2595 = vpop.f32.mrb[0].mxu0
        %v2596 = vadd.f32 %v2283, %v2595
        %v2597 = vpop.f32.mrb[0].mxu0
        %v2598 = vadd.f32 %v2285, %v2597
        %v2599 = vpop.f32.mrb[0].mxu0
        %v2600 = vadd.f32 %v2287, %v2599
        %v2601 = vpop.f32.mrb[0].mxu0
        %v2602 = vadd.f32 %v2289, %v2601
        %2603 = vmatprep.mubr.bf16.mxu0 %v1300
        %2604 = vmatmul.mubr.bf16.gmra.mrb[0].mxu0 %v1299
        %v2605 = vpop.f32.mrb[0].mxu0
        %v2606 = vadd.f32 %v2293, %v2605
        %v2607 = vpop.f32.mrb[0].mxu0
        %v2608 = vadd.f32 %v2295, %v2607
        %v2609 = vpop.f32.mrb[0].mxu0
        %v2610 = vadd.f32 %v2297, %v2609
        %v2611 = vpop.f32.mrb[0].mxu0
        %v2612 = vadd.f32 %v2299, %v2611
        %2613 = vmatprep.mubr.bf16.mxu0 %v1307
        %2614 = vmatmul.mubr.bf16.gmra.mrb[0].mxu0 %v1306
        %v2615 = vpop.f32.mrb[0].mxu0
        %v2616 = vadd.f32 %v2303, %v2615
        %v2617 = vpop.f32.mrb[0].mxu0
        %v2618 = vadd.f32 %v2305, %v2617
        %v2619 = vpop.f32.mrb[0].mxu0
        %v2620 = vadd.f32 %v2307, %v2619
        %v2621 = vpop.f32.mrb[0].mxu0
        %v2622 = vadd.f32 %v2309, %v2621
        %2623 = vmatprep.mubr.bf16.mxu0 %v1314
        %2624 = vmatmul.mubr.bf16.gmra.mrb[0].mxu0 %v1313
        %v2625 = vpop.f32.mrb[0].mxu0
        %v2626 = vadd.f32 %v2313, %v2625
        %v2627 = vpop.f32.mrb[0].mxu0
        %v2628 = vadd.f32 %v2315, %v2627
        %v2629 = vpop.f32.mrb[0].mxu0
        %v2630 = vadd.f32 %v2317, %v2629
        %v2631 = vpop.f32.mrb[0].mxu0
        %v2632 = vadd.f32 %v2319, %v2631
        %2633 = vmatprep.mubr.bf16.mxu0 %v1321
        %2634 = vmatmul.mubr.bf16.gmra.mrb[0].mxu0 %v1320
        %v2635 = vpop.f32.mrb[0].mxu0
        %v2636 = vadd.f32 %v2323, %v2635
        %v2637 = vpop.f32.mrb[0].mxu0
        %v2638 = vadd.f32 %v2325, %v2637
        %v2639 = vpop.f32.mrb[0].mxu0
        %v2640 = vadd.f32 %v2327, %v2639
        %v2641 = vpop.f32.mrb[0].mxu0
        %v2642 = vadd.f32 %v2329, %v2641
        %2643 = vmatprep.mubr.bf16.mxu0 %v1328
        %2644 = vmatmul.mubr.bf16.gmra.mrb[0].mxu0 %v1327
        %v2645 = vpop.f32.mrb[0].mxu0
        %v2646 = vadd.f32 %v2333, %v2645
        %v2647 = vpop.f32.mrb[0].mxu0
        %v2648 = vadd.f32 %v2335, %v2647
        %v2649 = vpop.f32.mrb[0].mxu0
        %v2650 = vadd.f32 %v2337, %v2649
        %v2651 = vpop.f32.mrb[0].mxu0
        %v2652 = vadd.f32 %v2339, %v2651
        %2653 = vmatprep.mubr.bf16.mxu0 %v1335
        %2654 = vmatmul.mubr.bf16.gmra.mrb[0].mxu0 %v1334
        %v2655 = vpop.f32.mrb[0].mxu0
        %v2656 = vadd.f32 %v2343, %v2655
        %v2657 = vpop.f32.mrb[0].mxu0
        %v2658 = vadd.f32 %v2345, %v2657
        %v2659 = vpop.f32.mrb[0].mxu0
        %v2660 = vadd.f32 %v2347, %v2659
        %v2661 = vpop.f32.mrb[0].mxu0
        %v2662 = vadd.f32 %v2349, %v2661
        %2663 = vmatprep.mubr.bf16.mxu0 %v1342
        %2664 = vmatmul.mubr.bf16.gmra.mrb[0].mxu0 %v1341
        %v2665 = vpop.f32.mrb[0].mxu0
        %v2666 = vadd.f32 %v2353, %v2665
        %v2667 = vpop.f32.mrb[0].mxu0
        %v2668 = vadd.f32 %v2355, %v2667
        %v2669 = vpop.f32.mrb[0].mxu0
        %v2670 = vadd.f32 %v2357, %v2669
        %v2671 = vpop.f32.mrb[0].mxu0
        %v2672 = vadd.f32 %v2359, %v2671
        %2673 = vmatprep.mubr.bf16.mxu0 %v1349
        %2674 = vmatmul.mubr.bf16.gmra.mrb[0].mxu0 %v1348
        %v2675 = vpop.f32.mrb[0].mxu0
        %v2676 = vadd.f32 %v2363, %v2675
        %v2677 = vpop.f32.mrb[0].mxu0
        %v2678 = vadd.f32 %v2365, %v2677
        %v2679 = vpop.f32.mrb[0].mxu0
        %v2680 = vadd.f32 %v2367, %v2679
        %v2681 = vpop.f32.mrb[0].mxu0
        %v2682 = vadd.f32 %v2369, %v2681
        %2683 = vmatprep.mubr.bf16.mxu0 %v1356
        %2684 = vmatmul.mubr.bf16.gmra.mrb[0].mxu0 %v1355
        %v2685 = vpop.f32.mrb[0].mxu0
        %v2686 = vadd.f32 %v2373, %v2685
        %v2687 = vpop.f32.mrb[0].mxu0
        %v2688 = vadd.f32 %v2375, %v2687
        %v2689 = vpop.f32.mrb[0].mxu0
        %v2690 = vadd.f32 %v2377, %v2689
        %v2691 = vpop.f32.mrb[0].mxu0
        %v2692 = vadd.f32 %v2379, %v2691
        %2693 = vmatprep.mubr.bf16.mxu0 %v1363
        %2694 = vmatmul.mubr.bf16.gmra.mrb[0].mxu0 %v1362
        %v2695 = vpop.f32.mrb[0].mxu0
        %v2696 = vadd.f32 %v2383, %v2695
        %v2697 = vpop.f32.mrb[0].mxu0
        %v2698 = vadd.f32 %v2385, %v2697
        %v2699 = vpop.f32.mrb[0].mxu0
        %v2700 = vadd.f32 %v2387, %v2699
        %v2701 = vpop.f32.mrb[0].mxu0
        %v2702 = vadd.f32 %v2389, %v2701
        %2703 = vmatprep.mubr.bf16.mxu0 %v1370
        %2704 = vmatmul.mubr.bf16.gmra.mrb[0].mxu0 %v1369
        %v2705 = vpop.f32.mrb[0].mxu0
        %v2706 = vadd.f32 %v2393, %v2705
        %v2707 = vpop.f32.mrb[0].mxu0
        %v2708 = vadd.f32 %v2395, %v2707
        %v2709 = vpop.f32.mrb[0].mxu0
        %v2710 = vadd.f32 %v2397, %v2709
        %v2711 = vpop.f32.mrb[0].mxu0
        %v2712 = vadd.f32 %v2399, %v2711
        %2713 = vmatprep.mubr.bf16.mxu0 %v1377
        %2714 = vmatmul.mubr.bf16.gmra.mrb[0].mxu0 %v1376
        %v2715 = vpop.f32.mrb[0].mxu0
        %v2716 = vadd.f32 %v2403, %v2715
        %v2717 = vpop.f32.mrb[0].mxu0
        %v2718 = vadd.f32 %v2405, %v2717
        %v2719 = vpop.f32.mrb[0].mxu0
        %v2720 = vadd.f32 %v2407, %v2719
        %v2721 = vpop.f32.mrb[0].mxu0
        %v2722 = vadd.f32 %v2409, %v2721
        %2723 = vmatprep.mubr.bf16.mxu0 %v1384
        %2724 = vmatmul.mubr.bf16.gmra.mrb[0].mxu0 %v1383
        %v2725 = vpop.f32.mrb[0].mxu0
        %v2726 = vadd.f32 %v2413, %v2725
        %v2727 = vpop.f32.mrb[0].mxu0
        %v2728 = vadd.f32 %v2415, %v2727
        %v2729 = vpop.f32.mrb[0].mxu0
        %v2730 = vadd.f32 %v2417, %v2729
        %v2731 = vpop.f32.mrb[0].mxu0
        %v2732 = vadd.f32 %v2419, %v2731
        %2733 = vmatprep.mubr.bf16.mxu0 %v1391
        %2734 = vmatmul.mubr.bf16.gmra.mrb[0].mxu0 %v1390
        %v2735 = vpop.f32.mrb[0].mxu0
        %v2736 = vadd.f32 %v2423, %v2735
        %v2737 = vpop.f32.mrb[0].mxu0
        %v2738 = vadd.f32 %v2425, %v2737
        %v2739 = vpop.f32.mrb[0].mxu0
        %v2740 = vadd.f32 %v2427, %v2739
        %v2741 = vpop.f32.mrb[0].mxu0
        %v2742 = vadd.f32 %v2429, %v2741
        %2743 = vmatprep.mubr.bf16.mxu0 %v1398
        %2744 = vmatmul.mubr.bf16.gmra.mrb[0].mxu0 %v1397
        %v2745 = vpop.f32.mrb[0].mxu0
        %v2746 = vadd.f32 %v2433, %v2745
        %v2747 = vpop.f32.mrb[0].mxu0
        %v2748 = vadd.f32 %v2435, %v2747
        %v2749 = vpop.f32.mrb[0].mxu0
        %v2750 = vadd.f32 %v2437, %v2749
        %v2751 = vpop.f32.mrb[0].mxu0
        %v2752 = vadd.f32 %v2439, %v2751
        %2753 = vmatprep.mubr.bf16.mxu0 %v1405
        %2754 = vmatmul.mubr.bf16.gmra.mrb[0].mxu0 %v1404
        %v2755 = vpop.f32.mrb[0].mxu0
        %v2756 = vadd.f32 %v2443, %v2755
        %v2757 = vpop.f32.mrb[0].mxu0
        %v2758 = vadd.f32 %v2445, %v2757
        %v2759 = vpop.f32.mrb[0].mxu0
        %v2760 = vadd.f32 %v2447, %v2759
        %v2761 = vpop.f32.mrb[0].mxu0
        %v2762 = vadd.f32 %v2449, %v2761
        %2763 = vmatprep.mubr.bf16.mxu0 %v1412
        %2764 = vmatmul.mubr.bf16.gmra.mrb[0].mxu0 %v1411
        %v2765 = vpop.f32.mrb[0].mxu0
        %v2766 = vadd.f32 %v2453, %v2765
        %v2767 = vpop.f32.mrb[0].mxu0
        %v2768 = vadd.f32 %v2455, %v2767
        %v2769 = vpop.f32.mrb[0].mxu0
        %v2770 = vadd.f32 %v2457, %v2769
        %v2771 = vpop.f32.mrb[0].mxu0
        %v2772 = vadd.f32 %v2459, %v2771
        %2773 = vmatprep.mubr.bf16.mxu0 %v1419
        %2774 = vmatmul.mubr.bf16.gmra.mrb[0].mxu0 %v1418
        %v2775 = vpop.f32.mrb[0].mxu0
        %v2776 = vadd.f32 %v2463, %v2775
        %v2777 = vpop.f32.mrb[0].mxu0
        %v2778 = vadd.f32 %v2465, %v2777
        %v2779 = vpop.f32.mrb[0].mxu0
        %v2780 = vadd.f32 %v2467, %v2779
        %v2781 = vpop.f32.mrb[0].mxu0
        %v2782 = vadd.f32 %v2469, %v2781
        %2783 = vmatprep.mubr.bf16.mxu0 %v1426
        %2784 = vmatmul.mubr.bf16.gmra.mrb[0].mxu0 %v1425
        %v2785 = vpop.f32.mrb[0].mxu0
        %v2786 = vadd.f32 %v2473, %v2785
        %v2787 = vpop.f32.mrb[0].mxu0
        %v2788 = vadd.f32 %v2475, %v2787
        %v2789 = vpop.f32.mrb[0].mxu0
        %v2790 = vadd.f32 %v2477, %v2789
        %v2791 = vpop.f32.mrb[0].mxu0
        %v2792 = vadd.f32 %v2479, %v2791
        %2793 = vmatprep.mubr.bf16.mxu0 %v1433
        %2794 = vmatmul.mubr.bf16.gmra.mrb[0].mxu0 %v1432
        %v2795 = vpop.f32.mrb[0].mxu0
        %v2796 = vadd.f32 %v2483, %v2795
        %v2797 = vpop.f32.mrb[0].mxu0
        %v2798 = vadd.f32 %v2485, %v2797
        %v2799 = vpop.f32.mrb[0].mxu0
        %v2800 = vadd.f32 %v2487, %v2799
        %v2801 = vpop.f32.mrb[0].mxu0
        %v2802 = vadd.f32 %v2489, %v2801
        %2803 = vmatprep.mubr.bf16.mxu0 %v1440
        %2804 = vmatmul.mubr.bf16.gmra.mrb[0].mxu0 %v1439
        %v2805 = vpop.f32.mrb[0].mxu0
        %v2806 = vadd.f32 %v2493, %v2805
        %v2807 = vpop.f32.mrb[0].mxu0
        %v2808 = vadd.f32 %v2495, %v2807
        %v2809 = vpop.f32.mrb[0].mxu0
        %v2810 = vadd.f32 %v2497, %v2809
        %v2811 = vpop.f32.mrb[0].mxu0
        %v2812 = vadd.f32 %v2499, %v2811
        %2813 = vmatprep.mubr.bf16.mxu0 %v1447
        %2814 = vmatmul.mubr.bf16.gmra.mrb[0].mxu0 %v1446
        %v2815 = vpop.f32.mrb[0].mxu0
        %v2816 = vadd.f32 %v2503, %v2815
        %v2817 = vpop.f32.mrb[0].mxu0
        %v2818 = vadd.f32 %v2505, %v2817
        %v2819 = vpop.f32.mrb[0].mxu0
        %v2820 = vadd.f32 %v2507, %v2819
        %v2821 = vpop.f32.mrb[0].mxu0
        %v2822 = vadd.f32 %v2509, %v2821
        %2823 = vmatprep.mubr.bf16.mxu0 %v1454
        %2824 = vmatmul.mubr.bf16.gmra.mrb[0].mxu0 %v1453
        %v2825 = vpop.f32.mrb[0].mxu0
        %v2826 = vadd.f32 %v2513, %v2825
        %v2827 = vpop.f32.mrb[0].mxu0
        %v2828 = vadd.f32 %v2515, %v2827
        %v2829 = vpop.f32.mrb[0].mxu0
        %v2830 = vadd.f32 %v2517, %v2829
        %v2831 = vpop.f32.mrb[0].mxu0
        %v2832 = vadd.f32 %v2519, %v2831
        %2833 = vmatprep.mubr.bf16.mxu0 %v1461
        %2834 = vmatmul.mubr.bf16.gmra.mrb[0].mxu0 %v1460
        %v2835 = vpop.f32.mrb[0].mxu0
        %v2836 = vadd.f32 %v2523, %v2835
        %v2837 = vpop.f32.mrb[0].mxu0
        %v2838 = vadd.f32 %v2525, %v2837
        %v2839 = vpop.f32.mrb[0].mxu0
        %v2840 = vadd.f32 %v2527, %v2839
        %v2841 = vpop.f32.mrb[0].mxu0
        %v2842 = vadd.f32 %v2529, %v2841
        %2843 = vmatprep.mubr.bf16.mxu0 %v1468
        %2844 = vmatmul.mubr.bf16.gmra.mrb[0].mxu0 %v1467
        %v2845 = vpop.f32.mrb[0].mxu0
        %v2846 = vadd.f32 %v2533, %v2845
        %v2847 = vpop.f32.mrb[0].mxu0
        %v2848 = vadd.f32 %v2535, %v2847
        %v2849 = vpop.f32.mrb[0].mxu0
        %v2850 = vadd.f32 %v2537, %v2849
        %v2851 = vpop.f32.mrb[0].mxu0
        %v2852 = vadd.f32 %v2539, %v2851
        %2853 = vdwg.mxu0
        %2854 = vmatprep.subr.bf16.mxu0 %v2069
        %2855 = vmatpush1.bf16.msra.mxu0 %v2068
        %2856 = vmatprep.subr.bf16.mxu0 %v2071
        %2857 = vmatpush1.bf16.msra.mxu0 %v2070
        %2858 = vmatprep.subr.bf16.mxu0 %v2073
        %2859 = vmatpush1.bf16.msra.mxu0 %v2072
        %2860 = vmatprep.subr.bf16.mxu0 %v2075
        %2861 = vmatpush1.bf16.msra.mxu0 %v2074
        %2862 = vmatprep.subr.bf16.mxu0 %v2077
        %2863 = vmatpush1.bf16.msra.mxu0 %v2076
        %2864 = vmatprep.subr.bf16.mxu0 %v2079
        %2865 = vmatpush1.bf16.msra.mxu0 %v2078
        %2866 = vmatprep.subr.bf16.mxu0 %v2081
        %2867 = vmatpush1.bf16.msra.mxu0 %v2080
        %2868 = vmatprep.subr.bf16.mxu0 %v2083
        %2869 = vmatpush1.bf16.msra.mxu0 %v2082
        %2870 = vmatprep.subr.bf16.mxu0 %v2085
        %2871 = vmatpush1.bf16.msra.mxu0 %v2084
        %2872 = vmatprep.subr.bf16.mxu0 %v2087
        %2873 = vmatpush1.bf16.msra.mxu0 %v2086
        %2874 = vmatprep.subr.bf16.mxu0 %v2089
        %2875 = vmatpush1.bf16.msra.mxu0 %v2088
        %2876 = vmatprep.subr.bf16.mxu0 %v2091
        %2877 = vmatpush1.bf16.msra.mxu0 %v2090
        %2878 = vmatprep.subr.bf16.mxu0 %v2093
        %2879 = vmatpush1.bf16.msra.mxu0 %v2092
        %2880 = vmatprep.subr.bf16.mxu0 %v2095
        %2881 = vmatpush1.bf16.msra.mxu0 %v2094
        %2882 = vmatprep.subr.bf16.mxu0 %v2097
        %2883 = vmatpush1.bf16.msra.mxu0 %v2096
        %2884 = vmatprep.subr.bf16.mxu0 %v2099
        %2885 = vmatpush1.bf16.msra.mxu0 %v2098
        %2886 = vmatprep.mubr.bf16.mxu0 %v1281
        %2887 = vmatmul.mubr.bf16.gmra.mrb[0].mxu0 %v1280
        %v2888 = vpop.f32.mrb[0].mxu0
        %v2889 = vadd.f32 %v2576, %v2888
        %v2890 = vpop.f32.mrb[0].mxu0
        %v2891 = vadd.f32 %v2578, %v2890
        %v2892 = vpop.f32.mrb[0].mxu0
        %v2893 = vadd.f32 %v2580, %v2892
        %v2894 = vpop.f32.mrb[0].mxu0
        %v2895 = vadd.f32 %v2582, %v2894
        %2896 = vmatprep.mubr.bf16.mxu0 %v1288
        %2897 = vmatmul.mubr.bf16.gmra.mrb[0].mxu0 %v1287
        %v2898 = vpop.f32.mrb[0].mxu0
        %v2899 = vadd.f32 %v2586, %v2898
        %v2900 = vpop.f32.mrb[0].mxu0
        %v2901 = vadd.f32 %v2588, %v2900
        %v2902 = vpop.f32.mrb[0].mxu0
        %v2903 = vadd.f32 %v2590, %v2902
        %v2904 = vpop.f32.mrb[0].mxu0
        %v2905 = vadd.f32 %v2592, %v2904
        %2906 = vmatprep.mubr.bf16.mxu0 %v1295
        %2907 = vmatmul.mubr.bf16.gmra.mrb[0].mxu0 %v1294
        %v2908 = vpop.f32.mrb[0].mxu0
        %v2909 = vadd.f32 %v2596, %v2908
        %v2910 = vpop.f32.mrb[0].mxu0
        %v2911 = vadd.f32 %v2598, %v2910
        %v2912 = vpop.f32.mrb[0].mxu0
        %v2913 = vadd.f32 %v2600, %v2912
        %v2914 = vpop.f32.mrb[0].mxu0
        %v2915 = vadd.f32 %v2602, %v2914
        %2916 = vmatprep.mubr.bf16.mxu0 %v1302
        %2917 = vmatmul.mubr.bf16.gmra.mrb[0].mxu0 %v1301
        %v2918 = vpop.f32.mrb[0].mxu0
        %v2919 = vadd.f32 %v2606, %v2918
        %v2920 = vpop.f32.mrb[0].mxu0
        %v2921 = vadd.f32 %v2608, %v2920
        %v2922 = vpop.f32.mrb[0].mxu0
        %v2923 = vadd.f32 %v2610, %v2922
        %v2924 = vpop.f32.mrb[0].mxu0
        %v2925 = vadd.f32 %v2612, %v2924
        %2926 = vmatprep.mubr.bf16.mxu0 %v1309
        %2927 = vmatmul.mubr.bf16.gmra.mrb[0].mxu0 %v1308
        %v2928 = vpop.f32.mrb[0].mxu0
        %v2929 = vadd.f32 %v2616, %v2928
        %v2930 = vpop.f32.mrb[0].mxu0
        %v2931 = vadd.f32 %v2618, %v2930
        %v2932 = vpop.f32.mrb[0].mxu0
        %v2933 = vadd.f32 %v2620, %v2932
        %v2934 = vpop.f32.mrb[0].mxu0
        %v2935 = vadd.f32 %v2622, %v2934
        %2936 = vmatprep.mubr.bf16.mxu0 %v1316
        %2937 = vmatmul.mubr.bf16.gmra.mrb[0].mxu0 %v1315
        %v2938 = vpop.f32.mrb[0].mxu0
        %v2939 = vadd.f32 %v2626, %v2938
        %v2940 = vpop.f32.mrb[0].mxu0
        %v2941 = vadd.f32 %v2628, %v2940
        %v2942 = vpop.f32.mrb[0].mxu0
        %v2943 = vadd.f32 %v2630, %v2942
        %v2944 = vpop.f32.mrb[0].mxu0
        %v2945 = vadd.f32 %v2632, %v2944
        %2946 = vmatprep.mubr.bf16.mxu0 %v1323
        %2947 = vmatmul.mubr.bf16.gmra.mrb[0].mxu0 %v1322
        %v2948 = vpop.f32.mrb[0].mxu0
        %v2949 = vadd.f32 %v2636, %v2948
        %v2950 = vpop.f32.mrb[0].mxu0
        %v2951 = vadd.f32 %v2638, %v2950
        %v2952 = vpop.f32.mrb[0].mxu0
        %v2953 = vadd.f32 %v2640, %v2952
        %v2954 = vpop.f32.mrb[0].mxu0
        %v2955 = vadd.f32 %v2642, %v2954
        %2956 = vmatprep.mubr.bf16.mxu0 %v1330
        %2957 = vmatmul.mubr.bf16.gmra.mrb[0].mxu0 %v1329
        %v2958 = vpop.f32.mrb[0].mxu0
        %v2959 = vadd.f32 %v2646, %v2958
        %v2960 = vpop.f32.mrb[0].mxu0
        %v2961 = vadd.f32 %v2648, %v2960
        %v2962 = vpop.f32.mrb[0].mxu0
        %v2963 = vadd.f32 %v2650, %v2962
        %v2964 = vpop.f32.mrb[0].mxu0
        %v2965 = vadd.f32 %v2652, %v2964
        %2966 = vmatprep.mubr.bf16.mxu0 %v1337
        %2967 = vmatmul.mubr.bf16.gmra.mrb[0].mxu0 %v1336
        %v2968 = vpop.f32.mrb[0].mxu0
        %v2969 = vadd.f32 %v2656, %v2968
        %v2970 = vpop.f32.mrb[0].mxu0
        %v2971 = vadd.f32 %v2658, %v2970
        %v2972 = vpop.f32.mrb[0].mxu0
        %v2973 = vadd.f32 %v2660, %v2972
        %v2974 = vpop.f32.mrb[0].mxu0
        %v2975 = vadd.f32 %v2662, %v2974
        %2976 = vmatprep.mubr.bf16.mxu0 %v1344
        %2977 = vmatmul.mubr.bf16.gmra.mrb[0].mxu0 %v1343
        %v2978 = vpop.f32.mrb[0].mxu0
        %v2979 = vadd.f32 %v2666, %v2978
        %v2980 = vpop.f32.mrb[0].mxu0
        %v2981 = vadd.f32 %v2668, %v2980
        %v2982 = vpop.f32.mrb[0].mxu0
        %v2983 = vadd.f32 %v2670, %v2982
        %v2984 = vpop.f32.mrb[0].mxu0
        %v2985 = vadd.f32 %v2672, %v2984
        %2986 = vmatprep.mubr.bf16.mxu0 %v1351
        %2987 = vmatmul.mubr.bf16.gmra.mrb[0].mxu0 %v1350
        %v2988 = vpop.f32.mrb[0].mxu0
        %v2989 = vadd.f32 %v2676, %v2988
        %v2990 = vpop.f32.mrb[0].mxu0
        %v2991 = vadd.f32 %v2678, %v2990
        %v2992 = vpop.f32.mrb[0].mxu0
        %v2993 = vadd.f32 %v2680, %v2992
        %v2994 = vpop.f32.mrb[0].mxu0
        %v2995 = vadd.f32 %v2682, %v2994
        %2996 = vmatprep.mubr.bf16.mxu0 %v1358
        %2997 = vmatmul.mubr.bf16.gmra.mrb[0].mxu0 %v1357
        %v2998 = vpop.f32.mrb[0].mxu0
        %v2999 = vadd.f32 %v2686, %v2998
        %v3000 = vpop.f32.mrb[0].mxu0
        %v3001 = vadd.f32 %v2688, %v3000
        %v3002 = vpop.f32.mrb[0].mxu0
        %v3003 = vadd.f32 %v2690, %v3002
        %v3004 = vpop.f32.mrb[0].mxu0
        %v3005 = vadd.f32 %v2692, %v3004
        %3006 = vmatprep.mubr.bf16.mxu0 %v1365
        %3007 = vmatmul.mubr.bf16.gmra.mrb[0].mxu0 %v1364
        %v3008 = vpop.f32.mrb[0].mxu0
        %v3009 = vadd.f32 %v2696, %v3008
        %v3010 = vpop.f32.mrb[0].mxu0
        %v3011 = vadd.f32 %v2698, %v3010
        %v3012 = vpop.f32.mrb[0].mxu0
        %v3013 = vadd.f32 %v2700, %v3012
        %v3014 = vpop.f32.mrb[0].mxu0
        %v3015 = vadd.f32 %v2702, %v3014
        %3016 = vmatprep.mubr.bf16.mxu0 %v1372
        %3017 = vmatmul.mubr.bf16.gmra.mrb[0].mxu0 %v1371
        %v3018 = vpop.f32.mrb[0].mxu0
        %v3019 = vadd.f32 %v2706, %v3018
        %v3020 = vpop.f32.mrb[0].mxu0
        %v3021 = vadd.f32 %v2708, %v3020
        %v3022 = vpop.f32.mrb[0].mxu0
        %v3023 = vadd.f32 %v2710, %v3022
        %v3024 = vpop.f32.mrb[0].mxu0
        %v3025 = vadd.f32 %v2712, %v3024
        %3026 = vmatprep.mubr.bf16.mxu0 %v1379
        %3027 = vmatmul.mubr.bf16.gmra.mrb[0].mxu0 %v1378
        %v3028 = vpop.f32.mrb[0].mxu0
        %v3029 = vadd.f32 %v2716, %v3028
        %v3030 = vpop.f32.mrb[0].mxu0
        %v3031 = vadd.f32 %v2718, %v3030
        %v3032 = vpop.f32.mrb[0].mxu0
        %v3033 = vadd.f32 %v2720, %v3032
        %v3034 = vpop.f32.mrb[0].mxu0
        %v3035 = vadd.f32 %v2722, %v3034
        %3036 = vmatprep.mubr.bf16.mxu0 %v1386
        %3037 = vmatmul.mubr.bf16.gmra.mrb[0].mxu0 %v1385
        %v3038 = vpop.f32.mrb[0].mxu0
        %v3039 = vadd.f32 %v2726, %v3038
        %v3040 = vpop.f32.mrb[0].mxu0
        %v3041 = vadd.f32 %v2728, %v3040
        %v3042 = vpop.f32.mrb[0].mxu0
        %v3043 = vadd.f32 %v2730, %v3042
        %v3044 = vpop.f32.mrb[0].mxu0
        %v3045 = vadd.f32 %v2732, %v3044
        %3046 = vmatprep.mubr.bf16.mxu0 %v1393
        %3047 = vmatmul.mubr.bf16.gmra.mrb[0].mxu0 %v1392
        %v3048 = vpop.f32.mrb[0].mxu0
        %v3049 = vadd.f32 %v2736, %v3048
        %v3050 = vpop.f32.mrb[0].mxu0
        %v3051 = vadd.f32 %v2738, %v3050
        %v3052 = vpop.f32.mrb[0].mxu0
        %v3053 = vadd.f32 %v2740, %v3052
        %v3054 = vpop.f32.mrb[0].mxu0
        %v3055 = vadd.f32 %v2742, %v3054
        %3056 = vmatprep.mubr.bf16.mxu0 %v1400
        %3057 = vmatmul.mubr.bf16.gmra.mrb[0].mxu0 %v1399
        %v3058 = vpop.f32.mrb[0].mxu0
        %v3059 = vadd.f32 %v2746, %v3058
        %v3060 = vpop.f32.mrb[0].mxu0
        %v3061 = vadd.f32 %v2748, %v3060
        %v3062 = vpop.f32.mrb[0].mxu0
        %v3063 = vadd.f32 %v2750, %v3062
        %v3064 = vpop.f32.mrb[0].mxu0
        %v3065 = vadd.f32 %v2752, %v3064
        %3066 = vmatprep.mubr.bf16.mxu0 %v1407
        %3067 = vmatmul.mubr.bf16.gmra.mrb[0].mxu0 %v1406
        %v3068 = vpop.f32.mrb[0].mxu0
        %v3069 = vadd.f32 %v2756, %v3068
        %v3070 = vpop.f32.mrb[0].mxu0
        %v3071 = vadd.f32 %v2758, %v3070
        %v3072 = vpop.f32.mrb[0].mxu0
        %v3073 = vadd.f32 %v2760, %v3072
        %v3074 = vpop.f32.mrb[0].mxu0
        %v3075 = vadd.f32 %v2762, %v3074
        %3076 = vmatprep.mubr.bf16.mxu0 %v1414
        %3077 = vmatmul.mubr.bf16.gmra.mrb[0].mxu0 %v1413
        %v3078 = vpop.f32.mrb[0].mxu0
        %v3079 = vadd.f32 %v2766, %v3078
        %v3080 = vpop.f32.mrb[0].mxu0
        %v3081 = vadd.f32 %v2768, %v3080
        %v3082 = vpop.f32.mrb[0].mxu0
        %v3083 = vadd.f32 %v2770, %v3082
        %v3084 = vpop.f32.mrb[0].mxu0
        %v3085 = vadd.f32 %v2772, %v3084
        %3086 = vmatprep.mubr.bf16.mxu0 %v1421
        %3087 = vmatmul.mubr.bf16.gmra.mrb[0].mxu0 %v1420
        %v3088 = vpop.f32.mrb[0].mxu0
        %v3089 = vadd.f32 %v2776, %v3088
        %v3090 = vpop.f32.mrb[0].mxu0
        %v3091 = vadd.f32 %v2778, %v3090
        %v3092 = vpop.f32.mrb[0].mxu0
        %v3093 = vadd.f32 %v2780, %v3092
        %v3094 = vpop.f32.mrb[0].mxu0
        %v3095 = vadd.f32 %v2782, %v3094
        %3096 = vmatprep.mubr.bf16.mxu0 %v1428
        %3097 = vmatmul.mubr.bf16.gmra.mrb[0].mxu0 %v1427
        %v3098 = vpop.f32.mrb[0].mxu0
        %v3099 = vadd.f32 %v2786, %v3098
        %v3100 = vpop.f32.mrb[0].mxu0
        %v3101 = vadd.f32 %v2788, %v3100
        %v3102 = vpop.f32.mrb[0].mxu0
        %v3103 = vadd.f32 %v2790, %v3102
        %v3104 = vpop.f32.mrb[0].mxu0
        %v3105 = vadd.f32 %v2792, %v3104
        %3106 = vmatprep.mubr.bf16.mxu0 %v1435
        %3107 = vmatmul.mubr.bf16.gmra.mrb[0].mxu0 %v1434
        %v3108 = vpop.f32.mrb[0].mxu0
        %v3109 = vadd.f32 %v2796, %v3108
        %v3110 = vpop.f32.mrb[0].mxu0
        %v3111 = vadd.f32 %v2798, %v3110
        %v3112 = vpop.f32.mrb[0].mxu0
        %v3113 = vadd.f32 %v2800, %v3112
        %v3114 = vpop.f32.mrb[0].mxu0
        %v3115 = vadd.f32 %v2802, %v3114
        %3116 = vmatprep.mubr.bf16.mxu0 %v1442
        %3117 = vmatmul.mubr.bf16.gmra.mrb[0].mxu0 %v1441
        %v3118 = vpop.f32.mrb[0].mxu0
        %v3119 = vadd.f32 %v2806, %v3118
        %v3120 = vpop.f32.mrb[0].mxu0
        %v3121 = vadd.f32 %v2808, %v3120
        %v3122 = vpop.f32.mrb[0].mxu0
        %v3123 = vadd.f32 %v2810, %v3122
        %v3124 = vpop.f32.mrb[0].mxu0
        %v3125 = vadd.f32 %v2812, %v3124
        %3126 = vmatprep.mubr.bf16.mxu0 %v1449
        %3127 = vmatmul.mubr.bf16.gmra.mrb[0].mxu0 %v1448
        %v3128 = vpop.f32.mrb[0].mxu0
        %v3129 = vadd.f32 %v2816, %v3128
        %v3130 = vpop.f32.mrb[0].mxu0
        %v3131 = vadd.f32 %v2818, %v3130
        %v3132 = vpop.f32.mrb[0].mxu0
        %v3133 = vadd.f32 %v2820, %v3132
        %v3134 = vpop.f32.mrb[0].mxu0
        %v3135 = vadd.f32 %v2822, %v3134
        %3136 = vmatprep.mubr.bf16.mxu0 %v1456
        %3137 = vmatmul.mubr.bf16.gmra.mrb[0].mxu0 %v1455
        %v3138 = vpop.f32.mrb[0].mxu0
        %v3139 = vadd.f32 %v2826, %v3138
        %v3140 = vpop.f32.mrb[0].mxu0
        %v3141 = vadd.f32 %v2828, %v3140
        %v3142 = vpop.f32.mrb[0].mxu0
        %v3143 = vadd.f32 %v2830, %v3142
        %v3144 = vpop.f32.mrb[0].mxu0
        %v3145 = vadd.f32 %v2832, %v3144
        %3146 = vmatprep.mubr.bf16.mxu0 %v1463
        %3147 = vmatmul.mubr.bf16.gmra.mrb[0].mxu0 %v1462
        %v3148 = vpop.f32.mrb[0].mxu0
        %v3149 = vadd.f32 %v2836, %v3148
        %v3150 = vpop.f32.mrb[0].mxu0
        %v3151 = vadd.f32 %v2838, %v3150
        %v3152 = vpop.f32.mrb[0].mxu0
        %v3153 = vadd.f32 %v2840, %v3152
        %v3154 = vpop.f32.mrb[0].mxu0
        %v3155 = vadd.f32 %v2842, %v3154
        %3156 = vmatprep.mubr.bf16.mxu0 %v1470
        %3157 = vmatmul.mubr.bf16.gmra.mrb[0].mxu0 %v1469
        %v3158 = vpop.f32.mrb[0].mxu0
        %v3159 = vadd.f32 %v2846, %v3158
        %v3160 = vpop.f32.mrb[0].mxu0
        %v3161 = vadd.f32 %v2848, %v3160
        %v3162 = vpop.f32.mrb[0].mxu0
        %v3163 = vadd.f32 %v2850, %v3162
        %v3164 = vpop.f32.mrb[0].mxu0
        %v3165 = vadd.f32 %v2852, %v3164
        %3166 = vdwg.mxu0
        %3167 = vmatprep.subr.bf16.mxu0 %v2101
        %3168 = vmatpush1.bf16.msra.mxu0 %v2100
        %3169 = vmatprep.subr.bf16.mxu0 %v2103
        %3170 = vmatpush1.bf16.msra.mxu0 %v2102
        %3171 = vmatprep.subr.bf16.mxu0 %v2105
        %3172 = vmatpush1.bf16.msra.mxu0 %v2104
        %3173 = vmatprep.subr.bf16.mxu0 %v2107
        %3174 = vmatpush1.bf16.msra.mxu0 %v2106
        %3175 = vmatprep.subr.bf16.mxu0 %v2109
        %3176 = vmatpush1.bf16.msra.mxu0 %v2108
        %3177 = vmatprep.subr.bf16.mxu0 %v2111
        %3178 = vmatpush1.bf16.msra.mxu0 %v2110
        %3179 = vmatprep.subr.bf16.mxu0 %v2113
        %3180 = vmatpush1.bf16.msra.mxu0 %v2112
        %3181 = vmatprep.subr.bf16.mxu0 %v2115
        %3182 = vmatpush1.bf16.msra.mxu0 %v2114
        %3183 = vmatprep.subr.bf16.mxu0 0
        %3184 = vmatpush1.bf16.msra.mxu0 0
        %3185 = vmatprep.subr.bf16.mxu0 0
        %3186 = vmatpush1.bf16.msra.mxu0 0
        %3187 = vmatprep.subr.bf16.mxu0 0
        %3188 = vmatpush1.bf16.msra.mxu0 0
        %3189 = vmatprep.subr.bf16.mxu0 0
        %3190 = vmatpush1.bf16.msra.mxu0 0
        %3191 = vmatprep.subr.bf16.mxu0 0
        %3192 = vmatpush1.bf16.msra.mxu0 0
        %3193 = vmatprep.subr.bf16.mxu0 0
        %3194 = vmatpush1.bf16.msra.mxu0 0
        %3195 = vmatprep.subr.bf16.mxu0 0
        %3196 = vmatpush1.bf16.msra.mxu0 0
        %3197 = vmatprep.subr.bf16.mxu0 0
        %3198 = vmatpush1.bf16.msra.mxu0 0
        %3199 = vmatprep.mubr.bf16.mxu0 0
        %3200 = vmatmul.mubr.bf16.gmra.mrb[0].mxu0 %v1282
        %v3201 = vpop.f32.mrb[0].mxu0
        %v3202 = vadd.f32 %v2889, %v3201
        %v3203 = vpop.f32.mrb[0].mxu0
        %v3204 = vadd.f32 %v2891, %v3203
        %v3205 = vpop.f32.mrb[0].mxu0
        %v3206 = vadd.f32 %v2893, %v3205
        %v3207 = vpop.f32.mrb[0].mxu0
        %v3208 = vadd.f32 %v2895, %v3207
        %3209 = vmatprep.mubr.bf16.mxu0 0
        %3210 = vmatmul.mubr.bf16.gmra.mrb[0].mxu0 %v1289
        %v3211 = vpop.f32.mrb[0].mxu0
        %v3212 = vadd.f32 %v2899, %v3211
        %v3213 = vpop.f32.mrb[0].mxu0
        %v3214 = vadd.f32 %v2901, %v3213
        %v3215 = vpop.f32.mrb[0].mxu0
        %v3216 = vadd.f32 %v2903, %v3215
        %v3217 = vpop.f32.mrb[0].mxu0
        %v3218 = vadd.f32 %v2905, %v3217
        %3219 = vmatprep.mubr.bf16.mxu0 0
        %3220 = vmatmul.mubr.bf16.gmra.mrb[0].mxu0 %v1296
        %v3221 = vpop.f32.mrb[0].mxu0
        %v3222 = vadd.f32 %v2909, %v3221
        %v3223 = vpop.f32.mrb[0].mxu0
        %v3224 = vadd.f32 %v2911, %v3223
        %v3225 = vpop.f32.mrb[0].mxu0
        %v3226 = vadd.f32 %v2913, %v3225
        %v3227 = vpop.f32.mrb[0].mxu0
        %v3228 = vadd.f32 %v2915, %v3227
        %3229 = vmatprep.mubr.bf16.mxu0 0
        %3230 = vmatmul.mubr.bf16.gmra.mrb[0].mxu0 %v1303
        %v3231 = vpop.f32.mrb[0].mxu0
        %v3232 = vadd.f32 %v2919, %v3231
        %v3233 = vpop.f32.mrb[0].mxu0
        %v3234 = vadd.f32 %v2921, %v3233
        %v3235 = vpop.f32.mrb[0].mxu0
        %v3236 = vadd.f32 %v2923, %v3235
        %v3237 = vpop.f32.mrb[0].mxu0
        %v3238 = vadd.f32 %v2925, %v3237
        %3239 = vmatprep.mubr.bf16.mxu0 0
        %3240 = vmatmul.mubr.bf16.gmra.mrb[0].mxu0 %v1310
        %v3241 = vpop.f32.mrb[0].mxu0
        %v3242 = vadd.f32 %v2929, %v3241
        %v3243 = vpop.f32.mrb[0].mxu0
        %v3244 = vadd.f32 %v2931, %v3243
        %v3245 = vpop.f32.mrb[0].mxu0
        %v3246 = vadd.f32 %v2933, %v3245
        %v3247 = vpop.f32.mrb[0].mxu0
        %v3248 = vadd.f32 %v2935, %v3247
        %3249 = vmatprep.mubr.bf16.mxu0 0
        %3250 = vmatmul.mubr.bf16.gmra.mrb[0].mxu0 %v1317
        %v3251 = vpop.f32.mrb[0].mxu0
        %v3252 = vadd.f32 %v2939, %v3251
        %v3253 = vpop.f32.mrb[0].mxu0
        %v3254 = vadd.f32 %v2941, %v3253
        %v3255 = vpop.f32.mrb[0].mxu0
        %v3256 = vadd.f32 %v2943, %v3255
        %v3257 = vpop.f32.mrb[0].mxu0
        %v3258 = vadd.f32 %v2945, %v3257
        %3259 = vmatprep.mubr.bf16.mxu0 0
        %3260 = vmatmul.mubr.bf16.gmra.mrb[0].mxu0 %v1324
        %v3261 = vpop.f32.mrb[0].mxu0
        %v3262 = vadd.f32 %v2949, %v3261
        %v3263 = vpop.f32.mrb[0].mxu0
        %v3264 = vadd.f32 %v2951, %v3263
        %v3265 = vpop.f32.mrb[0].mxu0
        %v3266 = vadd.f32 %v2953, %v3265
        %v3267 = vpop.f32.mrb[0].mxu0
        %v3268 = vadd.f32 %v2955, %v3267
        %3269 = vmatprep.mubr.bf16.mxu0 0
        %3270 = vmatmul.mubr.bf16.gmra.mrb[0].mxu0 %v1331
        %v3271 = vpop.f32.mrb[0].mxu0
        %v3272 = vadd.f32 %v2959, %v3271
        %v3273 = vpop.f32.mrb[0].mxu0
        %v3274 = vadd.f32 %v2961, %v3273
        %v3275 = vpop.f32.mrb[0].mxu0
        %v3276 = vadd.f32 %v2963, %v3275
        %v3277 = vpop.f32.mrb[0].mxu0
        %v3278 = vadd.f32 %v2965, %v3277
        %3279 = vmatprep.mubr.bf16.mxu0 0
        %3280 = vmatmul.mubr.bf16.gmra.mrb[0].mxu0 %v1338
        %v3281 = vpop.f32.mrb[0].mxu0
        %v3282 = vadd.f32 %v2969, %v3281
        %v3283 = vpop.f32.mrb[0].mxu0
        %v3284 = vadd.f32 %v2971, %v3283
        %v3285 = vpop.f32.mrb[0].mxu0
        %v3286 = vadd.f32 %v2973, %v3285
        %v3287 = vpop.f32.mrb[0].mxu0
        %v3288 = vadd.f32 %v2975, %v3287
        %3289 = vmatprep.mubr.bf16.mxu0 0
        %3290 = vmatmul.mubr.bf16.gmra.mrb[0].mxu0 %v1345
        %v3291 = vpop.f32.mrb[0].mxu0
        %v3292 = vadd.f32 %v2979, %v3291
        %v3293 = vpop.f32.mrb[0].mxu0
        %v3294 = vadd.f32 %v2981, %v3293
        %v3295 = vpop.f32.mrb[0].mxu0
        %v3296 = vadd.f32 %v2983, %v3295
        %v3297 = vpop.f32.mrb[0].mxu0
        %v3298 = vadd.f32 %v2985, %v3297
        %3299 = vmatprep.mubr.bf16.mxu0 0
        %3300 = vmatmul.mubr.bf16.gmra.mrb[0].mxu0 %v1352
        %v3301 = vpop.f32.mrb[0].mxu0
        %v3302 = vadd.f32 %v2989, %v3301
        %v3303 = vpop.f32.mrb[0].mxu0
        %v3304 = vadd.f32 %v2991, %v3303
        %v3305 = vpop.f32.mrb[0].mxu0
        %v3306 = vadd.f32 %v2993, %v3305
        %v3307 = vpop.f32.mrb[0].mxu0
        %v3308 = vadd.f32 %v2995, %v3307
        %3309 = vmatprep.mubr.bf16.mxu0 0
        %3310 = vmatmul.mubr.bf16.gmra.mrb[0].mxu0 %v1359
        %v3311 = vpop.f32.mrb[0].mxu0
        %v3312 = vadd.f32 %v2999, %v3311
        %v3313 = vpop.f32.mrb[0].mxu0
        %v3314 = vadd.f32 %v3001, %v3313
        %v3315 = vpop.f32.mrb[0].mxu0
        %v3316 = vadd.f32 %v3003, %v3315
        %v3317 = vpop.f32.mrb[0].mxu0
        %v3318 = vadd.f32 %v3005, %v3317
        %3319 = vmatprep.mubr.bf16.mxu0 0
        %3320 = vmatmul.mubr.bf16.gmra.mrb[0].mxu0 %v1366
        %v3321 = vpop.f32.mrb[0].mxu0
        %v3322 = vadd.f32 %v3009, %v3321
        %v3323 = vpop.f32.mrb[0].mxu0
        %v3324 = vadd.f32 %v3011, %v3323
        %v3325 = vpop.f32.mrb[0].mxu0
        %v3326 = vadd.f32 %v3013, %v3325
        %v3327 = vpop.f32.mrb[0].mxu0
        %v3328 = vadd.f32 %v3015, %v3327
        %3329 = vmatprep.mubr.bf16.mxu0 0
        %3330 = vmatmul.mubr.bf16.gmra.mrb[0].mxu0 %v1373
        %v3331 = vpop.f32.mrb[0].mxu0
        %v3332 = vadd.f32 %v3019, %v3331
        %v3333 = vpop.f32.mrb[0].mxu0
        %v3334 = vadd.f32 %v3021, %v3333
        %v3335 = vpop.f32.mrb[0].mxu0
        %v3336 = vadd.f32 %v3023, %v3335
        %v3337 = vpop.f32.mrb[0].mxu0
        %v3338 = vadd.f32 %v3025, %v3337
        %3339 = vmatprep.mubr.bf16.mxu0 0
        %3340 = vmatmul.mubr.bf16.gmra.mrb[0].mxu0 %v1380
        %v3341 = vpop.f32.mrb[0].mxu0
        %v3342 = vadd.f32 %v3029, %v3341
        %v3343 = vpop.f32.mrb[0].mxu0
        %v3344 = vadd.f32 %v3031, %v3343
        %v3345 = vpop.f32.mrb[0].mxu0
        %v3346 = vadd.f32 %v3033, %v3345
        %v3347 = vpop.f32.mrb[0].mxu0
        %v3348 = vadd.f32 %v3035, %v3347
        %3349 = vmatprep.mubr.bf16.mxu0 0
        %3350 = vmatmul.mubr.bf16.gmra.mrb[0].mxu0 %v1387
        %v3351 = vpop.f32.mrb[0].mxu0
        %v3352 = vadd.f32 %v3039, %v3351
        %v3353 = vpop.f32.mrb[0].mxu0
        %v3354 = vadd.f32 %v3041, %v3353
        %v3355 = vpop.f32.mrb[0].mxu0
        %v3356 = vadd.f32 %v3043, %v3355
        %v3357 = vpop.f32.mrb[0].mxu0
        %v3358 = vadd.f32 %v3045, %v3357
        %3359 = vmatprep.mubr.bf16.mxu0 0
        %3360 = vmatmul.mubr.bf16.gmra.mrb[0].mxu0 %v1394
        %v3361 = vpop.f32.mrb[0].mxu0
        %v3362 = vadd.f32 %v3049, %v3361
        %v3363 = vpop.f32.mrb[0].mxu0
        %v3364 = vadd.f32 %v3051, %v3363
        %v3365 = vpop.f32.mrb[0].mxu0
        %v3366 = vadd.f32 %v3053, %v3365
        %v3367 = vpop.f32.mrb[0].mxu0
        %v3368 = vadd.f32 %v3055, %v3367
        %3369 = vmatprep.mubr.bf16.mxu0 0
        %3370 = vmatmul.mubr.bf16.gmra.mrb[0].mxu0 %v1401
        %v3371 = vpop.f32.mrb[0].mxu0
        %v3372 = vadd.f32 %v3059, %v3371
        %v3373 = vpop.f32.mrb[0].mxu0
        %v3374 = vadd.f32 %v3061, %v3373
        %v3375 = vpop.f32.mrb[0].mxu0
        %v3376 = vadd.f32 %v3063, %v3375
        %v3377 = vpop.f32.mrb[0].mxu0
        %v3378 = vadd.f32 %v3065, %v3377
        %3379 = vmatprep.mubr.bf16.mxu0 0
        %3380 = vmatmul.mubr.bf16.gmra.mrb[0].mxu0 %v1408
        %v3381 = vpop.f32.mrb[0].mxu0
        %v3382 = vadd.f32 %v3069, %v3381
        %v3383 = vpop.f32.mrb[0].mxu0
        %v3384 = vadd.f32 %v3071, %v3383
        %v3385 = vpop.f32.mrb[0].mxu0
        %v3386 = vadd.f32 %v3073, %v3385
        %v3387 = vpop.f32.mrb[0].mxu0
        %v3388 = vadd.f32 %v3075, %v3387
        %3389 = vmatprep.mubr.bf16.mxu0 0
        %3390 = vmatmul.mubr.bf16.gmra.mrb[0].mxu0 %v1415
        %v3391 = vpop.f32.mrb[0].mxu0
        %v3392 = vadd.f32 %v3079, %v3391
        %v3393 = vpop.f32.mrb[0].mxu0
        %v3394 = vadd.f32 %v3081, %v3393
        %v3395 = vpop.f32.mrb[0].mxu0
        %v3396 = vadd.f32 %v3083, %v3395
        %v3397 = vpop.f32.mrb[0].mxu0
        %v3398 = vadd.f32 %v3085, %v3397
        %3399 = vmatprep.mubr.bf16.mxu0 0
        %3400 = vmatmul.mubr.bf16.gmra.mrb[0].mxu0 %v1422
        %v3401 = vpop.f32.mrb[0].mxu0
        %v3402 = vadd.f32 %v3089, %v3401
        %v3403 = vpop.f32.mrb[0].mxu0
        %v3404 = vadd.f32 %v3091, %v3403
        %v3405 = vpop.f32.mrb[0].mxu0
        %v3406 = vadd.f32 %v3093, %v3405
        %v3407 = vpop.f32.mrb[0].mxu0
        %v3408 = vadd.f32 %v3095, %v3407
        %3409 = vmatprep.mubr.bf16.mxu0 0
        %3410 = vmatmul.mubr.bf16.gmra.mrb[0].mxu0 %v1429
        %v3411 = vpop.f32.mrb[0].mxu0
        %v3412 = vadd.f32 %v3099, %v3411
        %v3413 = vpop.f32.mrb[0].mxu0
        %v3414 = vadd.f32 %v3101, %v3413
        %v3415 = vpop.f32.mrb[0].mxu0
        %v3416 = vadd.f32 %v3103, %v3415
        %v3417 = vpop.f32.mrb[0].mxu0
        %v3418 = vadd.f32 %v3105, %v3417
        %3419 = vmatprep.mubr.bf16.mxu0 0
        %3420 = vmatmul.mubr.bf16.gmra.mrb[0].mxu0 %v1436
        %v3421 = vpop.f32.mrb[0].mxu0
        %v3422 = vadd.f32 %v3109, %v3421
        %v3423 = vpop.f32.mrb[0].mxu0
        %v3424 = vadd.f32 %v3111, %v3423
        %v3425 = vpop.f32.mrb[0].mxu0
        %v3426 = vadd.f32 %v3113, %v3425
        %v3427 = vpop.f32.mrb[0].mxu0
        %v3428 = vadd.f32 %v3115, %v3427
        %3429 = vmatprep.mubr.bf16.mxu0 0
        %3430 = vmatmul.mubr.bf16.gmra.mrb[0].mxu0 %v1443
        %v3431 = vpop.f32.mrb[0].mxu0
        %v3432 = vadd.f32 %v3119, %v3431
        %v3433 = vpop.f32.mrb[0].mxu0
        %v3434 = vadd.f32 %v3121, %v3433
        %v3435 = vpop.f32.mrb[0].mxu0
        %v3436 = vadd.f32 %v3123, %v3435
        %v3437 = vpop.f32.mrb[0].mxu0
        %v3438 = vadd.f32 %v3125, %v3437
        %3439 = vmatprep.mubr.bf16.mxu0 0
        %3440 = vmatmul.mubr.bf16.gmra.mrb[0].mxu0 %v1450
        %v3441 = vpop.f32.mrb[0].mxu0
        %v3442 = vadd.f32 %v3129, %v3441
        %v3443 = vpop.f32.mrb[0].mxu0
        %v3444 = vadd.f32 %v3131, %v3443
        %v3445 = vpop.f32.mrb[0].mxu0
        %v3446 = vadd.f32 %v3133, %v3445
        %v3447 = vpop.f32.mrb[0].mxu0
        %v3448 = vadd.f32 %v3135, %v3447
        %3449 = vmatprep.mubr.bf16.mxu0 0
        %3450 = vmatmul.mubr.bf16.gmra.mrb[0].mxu0 %v1457
        %v3451 = vpop.f32.mrb[0].mxu0
        %v3452 = vadd.f32 %v3139, %v3451
        %v3453 = vpop.f32.mrb[0].mxu0
        %v3454 = vadd.f32 %v3141, %v3453
        %v3455 = vpop.f32.mrb[0].mxu0
        %v3456 = vadd.f32 %v3143, %v3455
        %v3457 = vpop.f32.mrb[0].mxu0
        %v3458 = vadd.f32 %v3145, %v3457
        %3459 = vmatprep.mubr.bf16.mxu0 0
        %3460 = vmatmul.mubr.bf16.gmra.mrb[0].mxu0 %v1464
        %v3461 = vpop.f32.mrb[0].mxu0
        %v3462 = vadd.f32 %v3149, %v3461
        %v3463 = vpop.f32.mrb[0].mxu0
        %v3464 = vadd.f32 %v3151, %v3463
        %v3465 = vpop.f32.mrb[0].mxu0
        %v3466 = vadd.f32 %v3153, %v3465
        %v3467 = vpop.f32.mrb[0].mxu0
        %v3468 = vadd.f32 %v3155, %v3467
        %3469 = vmatprep.mubr.bf16.mxu0 0
        %3470 = vmatmul.mubr.bf16.gmra.mrb[0].mxu0 %v1471
        %v3471 = vpop.f32.mrb[0].mxu0
        %v3472 = vadd.f32 %v3159, %v3471
        %v3473 = vpop.f32.mrb[0].mxu0
        %v3474 = vadd.f32 %v3161, %v3473
        %v3475 = vpop.f32.mrb[0].mxu0
        %v3476 = vadd.f32 %v3163, %v3475
        %v3477 = vpop.f32.mrb[0].mxu0
        %v3478 = vadd.f32 %v3165, %v3477
        %3479 = vdwg.mxu0
        %3480 = vst [vmem:[%s209] sm:$0xff] %v3202
        %vm3481 = vcmask 556032
        %3482 = vst.msk [vmem:[%s209 + $0x8] sm:$0xff] %vm3481, %v3204
        %3483 = vst [vmem:[%s209 + $0x10] sm:$0xff] %v3206
        %3484 = vst.msk [vmem:[%s209 + $0x18] sm:$0xff] %vm3481, %v3208
        %3485 = vst [vmem:[%s209 + $0x20] sm:$0xff] %v3212
        %3486 = vst.msk [vmem:[%s209 + $0x28] sm:$0xff] %vm3481, %v3214
        %3487 = vst [vmem:[%s209 + $0x30] sm:$0xff] %v3216
        %3488 = vst.msk [vmem:[%s209 + $0x38] sm:$0xff] %vm3481, %v3218
        %3489 = vst [vmem:[%s209 + $0x40] sm:$0xff] %v3222
        %3490 = vst.msk [vmem:[%s209 + $0x48] sm:$0xff] %vm3481, %v3224
        %3491 = vst [vmem:[%s209 + $0x50] sm:$0xff] %v3226
        %3492 = vst.msk [vmem:[%s209 + $0x58] sm:$0xff] %vm3481, %v3228
        %3493 = vst [vmem:[%s209 + $0x60] sm:$0xff] %v3232
        %3494 = vst.msk [vmem:[%s209 + $0x68] sm:$0xff] %vm3481, %v3234
        %3495 = vst [vmem:[%s209 + $0x70] sm:$0xff] %v3236
        %3496 = vst.msk [vmem:[%s209 + $0x78] sm:$0xff] %vm3481, %v3238
        %3497 = vst [vmem:[%s209 + $0x80] sm:$0xff] %v3242
        %3498 = vst.msk [vmem:[%s209 + $0x88] sm:$0xff] %vm3481, %v3244
        %3499 = vst [vmem:[%s209 + $0x90] sm:$0xff] %v3246
        %3500 = vst.msk [vmem:[%s209 + $0x98] sm:$0xff] %vm3481, %v3248
        %3501 = vst [vmem:[%s209 + $0xa0] sm:$0xff] %v3252
        %3502 = vst.msk [vmem:[%s209 + $0xa8] sm:$0xff] %vm3481, %v3254
        %3503 = vst [vmem:[%s209 + $0xb0] sm:$0xff] %v3256
        %3504 = vst.msk [vmem:[%s209 + $0xb8] sm:$0xff] %vm3481, %v3258
        %3505 = vst [vmem:[%s209 + $0xc0] sm:$0xff] %v3262
        %3506 = vst.msk [vmem:[%s209 + $0xc8] sm:$0xff] %vm3481, %v3264
        %3507 = vst [vmem:[%s209 + $0xd0] sm:$0xff] %v3266
        %3508 = vst.msk [vmem:[%s209 + $0xd8] sm:$0xff] %vm3481, %v3268
        %3509 = vst [vmem:[%s209 + $0xe0] sm:$0xff] %v3272
        %3510 = vst.msk [vmem:[%s209 + $0xe8] sm:$0xff] %vm3481, %v3274
        %3511 = vst [vmem:[%s209 + $0xf0] sm:$0xff] %v3276
        %3512 = vst.msk [vmem:[%s209 + $0xf8] sm:$0xff] %vm3481, %v3278
        %3513 = vst [vmem:[%s209 + $0x100] sm:$0xff] %v3282
        %3514 = vst.msk [vmem:[%s209 + $0x108] sm:$0xff] %vm3481, %v3284
        %3515 = vst [vmem:[%s209 + $0x110] sm:$0xff] %v3286
        %3516 = vst.msk [vmem:[%s209 + $0x118] sm:$0xff] %vm3481, %v3288
        %3517 = vst [vmem:[%s209 + $0x120] sm:$0xff] %v3292
        %3518 = vst.msk [vmem:[%s209 + $0x128] sm:$0xff] %vm3481, %v3294
        %3519 = vst [vmem:[%s209 + $0x130] sm:$0xff] %v3296
        %3520 = vst.msk [vmem:[%s209 + $0x138] sm:$0xff] %vm3481, %v3298
        %3521 = vst [vmem:[%s209 + $0x140] sm:$0xff] %v3302
        %3522 = vst.msk [vmem:[%s209 + $0x148] sm:$0xff] %vm3481, %v3304
        %3523 = vst [vmem:[%s209 + $0x150] sm:$0xff] %v3306
        %3524 = vst.msk [vmem:[%s209 + $0x158] sm:$0xff] %vm3481, %v3308
        %3525 = vst [vmem:[%s209 + $0x160] sm:$0xff] %v3312
        %3526 = vst.msk [vmem:[%s209 + $0x168] sm:$0xff] %vm3481, %v3314
        %3527 = vst [vmem:[%s209 + $0x170] sm:$0xff] %v3316
        %3528 = vst.msk [vmem:[%s209 + $0x178] sm:$0xff] %vm3481, %v3318
        %3529 = vst [vmem:[%s209 + $0x180] sm:$0xff] %v3322
        %3530 = vst.msk [vmem:[%s209 + $0x188] sm:$0xff] %vm3481, %v3324
        %3531 = vst [vmem:[%s209 + $0x190] sm:$0xff] %v3326
        %3532 = vst.msk [vmem:[%s209 + $0x198] sm:$0xff] %vm3481, %v3328
        %3533 = vst [vmem:[%s209 + $0x1a0] sm:$0xff] %v3332
        %3534 = vst.msk [vmem:[%s209 + $0x1a8] sm:$0xff] %vm3481, %v3334
        %3535 = vst [vmem:[%s209 + $0x1b0] sm:$0xff] %v3336
        %3536 = vst.msk [vmem:[%s209 + $0x1b8] sm:$0xff] %vm3481, %v3338
        %3537 = vst [vmem:[%s209 + $0x1c0] sm:$0xff] %v3342
        %3538 = vst.msk [vmem:[%s209 + $0x1c8] sm:$0xff] %vm3481, %v3344
        %3539 = vst [vmem:[%s209 + $0x1d0] sm:$0xff] %v3346
        %3540 = vst.msk [vmem:[%s209 + $0x1d8] sm:$0xff] %vm3481, %v3348
        %3541 = vst [vmem:[%s209 + $0x1e0] sm:$0xff] %v3352
        %3542 = vst.msk [vmem:[%s209 + $0x1e8] sm:$0xff] %vm3481, %v3354
        %3543 = vst [vmem:[%s209 + $0x1f0] sm:$0xff] %v3356
        %3544 = vst.msk [vmem:[%s209 + $0x1f8] sm:$0xff] %vm3481, %v3358
        %3545 = vst [vmem:[%s209 + $0x200] sm:$0xff] %v3362
        %3546 = vst.msk [vmem:[%s209 + $0x208] sm:$0xff] %vm3481, %v3364
        %3547 = vst [vmem:[%s209 + $0x210] sm:$0xff] %v3366
        %3548 = vst.msk [vmem:[%s209 + $0x218] sm:$0xff] %vm3481, %v3368
        %3549 = vst [vmem:[%s209 + $0x220] sm:$0xff] %v3372
        %3550 = vst.msk [vmem:[%s209 + $0x228] sm:$0xff] %vm3481, %v3374
        %3551 = vst [vmem:[%s209 + $0x230] sm:$0xff] %v3376
        %3552 = vst.msk [vmem:[%s209 + $0x238] sm:$0xff] %vm3481, %v3378
        %3553 = vst [vmem:[%s209 + $0x240] sm:$0xff] %v3382
        %3554 = vst.msk [vmem:[%s209 + $0x248] sm:$0xff] %vm3481, %v3384
        %3555 = vst [vmem:[%s209 + $0x250] sm:$0xff] %v3386
        %3556 = vst.msk [vmem:[%s209 + $0x258] sm:$0xff] %vm3481, %v3388
        %3557 = vst [vmem:[%s209 + $0x260] sm:$0xff] %v3392
        %3558 = vst.msk [vmem:[%s209 + $0x268] sm:$0xff] %vm3481, %v3394
        %3559 = vst [vmem:[%s209 + $0x270] sm:$0xff] %v3396
        %3560 = vst.msk [vmem:[%s209 + $0x278] sm:$0xff] %vm3481, %v3398
        %3561 = vst [vmem:[%s209 + $0x280] sm:$0xff] %v3402
        %3562 = vst.msk [vmem:[%s209 + $0x288] sm:$0xff] %vm3481, %v3404
        %3563 = vst [vmem:[%s209 + $0x290] sm:$0xff] %v3406
        %3564 = vst.msk [vmem:[%s209 + $0x298] sm:$0xff] %vm3481, %v3408
        %3565 = vst [vmem:[%s209 + $0x2a0] sm:$0xff] %v3412
        %3566 = vst.msk [vmem:[%s209 + $0x2a8] sm:$0xff] %vm3481, %v3414
        %3567 = vst [vmem:[%s209 + $0x2b0] sm:$0xff] %v3416
        %3568 = vst.msk [vmem:[%s209 + $0x2b8] sm:$0xff] %vm3481, %v3418
        %3569 = vst [vmem:[%s209 + $0x2c0] sm:$0xff] %v3422
        %3570 = vst.msk [vmem:[%s209 + $0x2c8] sm:$0xff] %vm3481, %v3424
        %3571 = vst [vmem:[%s209 + $0x2d0] sm:$0xff] %v3426
        %3572 = vst.msk [vmem:[%s209 + $0x2d8] sm:$0xff] %vm3481, %v3428
        %3573 = vst [vmem:[%s209 + $0x2e0] sm:$0xff] %v3432
        %3574 = vst.msk [vmem:[%s209 + $0x2e8] sm:$0xff] %vm3481, %v3434
        %3575 = vst [vmem:[%s209 + $0x2f0] sm:$0xff] %v3436
        %3576 = vst.msk [vmem:[%s209 + $0x2f8] sm:$0xff] %vm3481, %v3438
        %3577 = vst [vmem:[%s209 + $0x300] sm:$0xff] %v3442
        %3578 = vst.msk [vmem:[%s209 + $0x308] sm:$0xff] %vm3481, %v3444
        %3579 = vst [vmem:[%s209 + $0x310] sm:$0xff] %v3446
        %3580 = vst.msk [vmem:[%s209 + $0x318] sm:$0xff] %vm3481, %v3448
        %3581 = vst [vmem:[%s209 + $0x320] sm:$0xff] %v3452
        %3582 = vst.msk [vmem:[%s209 + $0x328] sm:$0xff] %vm3481, %v3454
        %3583 = vst [vmem:[%s209 + $0x330] sm:$0xff] %v3456
        %3584 = vst.msk [vmem:[%s209 + $0x338] sm:$0xff] %vm3481, %v3458
        %3585 = vst [vmem:[%s209 + $0x340] sm:$0xff] %v3462
        %3586 = vst.msk [vmem:[%s209 + $0x348] sm:$0xff] %vm3481, %v3464
        %3587 = vst [vmem:[%s209 + $0x350] sm:$0xff] %v3466
        %3588 = vst.msk [vmem:[%s209 + $0x358] sm:$0xff] %vm3481, %v3468
        %3589 = vst [vmem:[%s209 + $0x360] sm:$0xff] %v3472
        %3590 = vst.msk [vmem:[%s209 + $0x368] sm:$0xff] %vm3481, %v3474
        %3591 = vst [vmem:[%s209 + $0x370] sm:$0xff] %v3476
        %3592 = vst.msk [vmem:[%s209 + $0x378] sm:$0xff] %vm3481, %v3478
        %s3593 = smul.u32 56, %s21
        %p3594 = scmp.lt.s32.totalorder %s20, 0
        %s3595 = scalar_select %p3594, %s20, 0
        %p3596 = scmp.lt.s32.totalorder %s3593, 111
        %s3597 = scalar_select %p3596, %s3593, 111
        %s3598 = smul.addr %s3597, 2
        %s3599 = smul.addr %s3595, 224
        %s3600 = sadd.s32 %s3598, %s3599
        %s3601 = smul.addr %s3600, 8
        %s3602 = scalar_lea.vmem %s2, %s3601
        // Predicated region
        $region33: #{tpu_custom_call.1} parent=27 // pred_check
          %p3603 = pneg %p100
        $region34: #{tpu_custom_call.1} parent=27 // pred_check_branch
          %3605 = sbr.rel (%p3603) target = $region36
        $region35: #{tpu_custom_call.1} parent=27 // pred_region
          %s3606 = smul.u32 56, %s21
        $region36: #{tpu_custom_call.1} parent=27 // pred_fallthru
          _
      $region28: #{tpu_custom_call.1} parent=5 // pred_fallthru
        _
      %p3607 = scmp.le.s32.totalorder 2, %s11
      // Predicated region
      $region37: #{tpu_custom_call.1} parent=5 // pred_check
        %p3608 = pneg %p3607
      $region38: #{tpu_custom_call.1} parent=5 // pred_check_branch
        %3610 = sbr.rel (%p3608) target = $region40
      $region39: #{tpu_custom_call.1} parent=5 // pred_region
        %s3611 = ssub.s32 %s11, 2
        // Predicated region
        $region41: #{tpu_custom_call.1} parent=39 // pred_check
          %p3612 = pneg %p106
        $region42: #{tpu_custom_call.1} parent=39 // pred_check_branch
          %3614 = sbr.rel (%p3612) target = $region44
        $region43: #{tpu_custom_call.1} parent=39 // pred_region
          %s3615 = smul.u32 56, %s23
          %p3616 = scmp.lt.s32.totalorder %s22, 0
          %s3617 = scalar_select %p3616, %s22, 0
          %p3618 = scmp.lt.s32.totalorder %s3615, 111
          %s3619 = scalar_select %p3618, %s3615, 111
          %s3620 = smul.addr %s3619, 2
          %s3621 = smul.addr %s3617, 224
          %s3622 = sadd.s32 %s3620, %s3621
          %s3623 = smul.addr %s3622, 8
          %s3624 = scalar_lea.vmem %s2, %s3623
        $region44: #{tpu_custom_call.1} parent=39 // pred_fallthru
          _
      $region40: #{tpu_custom_call.1} parent=5 // pred_fallthru
        _
    $region6: #{tpu_custom_call.1} parent=1 // loop_footer
      %s15 = sadd.s32 1, %s11
    $region7: #{tpu_custom_call.1} parent=1 // loop_footer_branch
      %10 = sbr.rel target = $region3
    $region8: #{tpu_custom_call.1} parent=1 // loop_exit
      _
    %3625 = vsyncpa [#allocation3], 1
    %s3626 = scalar_lea.sflag [#allocation3], 1
    %3627 = vsyncpa %s3626, 1

</llo_original>
